<compile_context>
chip_gen: v7x
topology: tpu7x:2x2x1
jax: 0.10.0
libtpu: 0.0.40
codegen_flags: <defaults>
</compile_context>

<pallas_src>
import jax
import jax.numpy as jnp
from jax import lax
from jax.experimental import pallas as pl
from jax.experimental.pallas import tpu as pltpu


def _round_up(x, m):
    return (x + m - 1) // m * m


def _sigmoid(z):
    # exp -> EUP, approximate reciprocal -> EUP: cheap epilogue, no VPU divide.
    return pl.reciprocal(1.0 + jnp.exp(-z), approx=True)


def _cls_kernel_single(x_ref, w_ref, b_ref, o_ref):
    # Whole K resident: z[n, c] = sum_k x[n, k] * w[c, k]  (contract last dims)
    z = lax.dot_general(
        x_ref[...], w_ref[...],
        dimension_numbers=(((1,), (1,)), ((), ())),
        preferred_element_type=jnp.float32,
    )
    o_ref[...] = _sigmoid(z + b_ref[...]).astype(o_ref.dtype)


def _cls_kernel_reduce(x_ref, w_ref, b_ref, o_ref):
    # K-tiled reduction: accumulate directly into the resident f32 output block.
    k = pl.program_id(1)

    @pl.when(k == 0)
    def _():
        o_ref[...] = jnp.zeros_like(o_ref)

    o_ref[...] += lax.dot_general(
        x_ref[...], w_ref[...],
        dimension_numbers=(((1,), (1,)), ((), ())),
        preferred_element_type=jnp.float32,
    )

    @pl.when(k == pl.num_programs(1) - 1)
    def _():
        o_ref[...] = _sigmoid(o_ref[...] + b_ref[...]).astype(o_ref.dtype)


def cls_mode_forward(x, weight, bias, *, compute_dtype=jnp.bfloat16,
                     vmem_budget_bytes=24 * 1024 * 1024):
    """Forward pass of clsMode.

    x:      (N, Cin, 32, 32) float32 (NCHW; spatial must equal kernel_size=32)
    weight: (Cls, Cin, 32, 32) float32
    bias:   (Cls,) float32
    returns (N, Cls) float32  -- conv (1x1 spatial output) -> flatten -> sigmoid
    """
    N, Cin, H, W = x.shape
    Cls = weight.shape[0]
    # TODO(synk): inputs larger than 32x32 would produce a multi-position conv
    # output; this head-specific kernel assumes the usual 32x32 input.
    assert (H, W) == (32, 32), "clsMode kernel assumes 32x32 input (kernel_size=32)"
    K = Cin * H * W  # multiple of 1024, so always MXU/lane aligned

    LANE = 128
    SUB = 16  # bf16 sublane packing; also satisfies the f32 requirement of 8

    Cls_pad = _round_up(Cls, LANE)
    N_pad = _round_up(N, SUB)

    # Flatten (contiguous reshapes) + cast to compute dtype.
    # TODO(synk): for inference, the weight reshape/pad/cast should be hoisted
    # to model-load time; it is per-call here only to stay self-contained.
    x_flat = x.reshape(N, K).astype(compute_dtype)
    w_flat = weight.reshape(Cls, K).astype(compute_dtype)   # (Cls, K), no transpose
    b_row = bias.astype(jnp.float32).reshape(1, Cls)

    if N_pad != N:
        x_flat = jnp.pad(x_flat, ((0, N_pad - N), (0, 0)))
    if Cls_pad != Cls:
        w_flat = jnp.pad(w_flat, ((0, Cls_pad - Cls), (0, 0)))
        b_row = jnp.pad(b_row, ((0, 0), (0, Cls_pad - Cls)))

    # N-block size: one block for small batches, else 256-row tiles
    # (parallel grid axis -> both v7x TensorCores get work).
    nb = N_pad if N_pad <= 256 else 256
    if N_pad % nb != 0:
        extra = _round_up(N_pad, nb) - N_pad
        x_flat = jnp.pad(x_flat, ((0, extra), (0, 0)))
        N_pad += extra
    num_nb = N_pad // nb

    el = jnp.dtype(compute_dtype).itemsize
    out_bytes = nb * Cls_pad * 4 + Cls_pad * 4
    single_shot_bytes = 2 * (nb + Cls_pad) * K * el + out_bytes  # double-buffered inputs

    vmem_limit = 48 * 1024 * 1024  # safe on v5e/v6e (128 MiB) and v7x (64 MiB)

    if single_shot_bytes <= vmem_budget_bytes:
        # ---- Path A: whole reduction in one grid step (no accumulator). ----
        out = pl.pallas_call(
            _cls_kernel_single,
            out_shape=jax.ShapeDtypeStruct((N_pad, Cls_pad), jnp.float32),
            grid_spec=pltpu.PrefetchScalarGridSpec(
                num_scalar_prefetch=0,
                grid=(num_nb,),
                in_specs=[
                    pl.BlockSpec((nb, K), lambda i: (i, 0)),
                    pl.BlockSpec((Cls_pad, K), lambda i: (0, 0)),
                    pl.BlockSpec((1, Cls_pad), lambda i: (0, 0)),
                ],
                out_specs=pl.BlockSpec((nb, Cls_pad), lambda i: (i, 0)),
            ),
            compiler_params=pltpu.CompilerParams(
                dimension_semantics=("parallel",),
                vmem_limit_bytes=vmem_limit,
            ),
        )(x_flat, w_flat, b_row)
    else:
        # ---- Path B: K-tiled reduction, accumulate into the output block. ----
        tk = 2048
        while tk > 256 and 2 * (nb + Cls_pad) * tk * el + out_bytes > vmem_budget_bytes:
            tk //= 2  # stays a multiple of 256 (MXU-aligned)
        K_pad = _round_up(K, tk)
        if K_pad != K:
            pad = K_pad - K
            x_flat = jnp.pad(x_flat, ((0, 0), (0, pad)))
            w_flat = jnp.pad(w_flat, ((0, 0), (0, pad)))

        out = pl.pallas_call(
            _cls_kernel_reduce,
            out_shape=jax.ShapeDtypeStruct((N_pad, Cls_pad), jnp.float32),
            grid_spec=pltpu.PrefetchScalarGridSpec(
                num_scalar_prefetch=0,
                grid=(num_nb, K_pad // tk),
                in_specs=[
                    pl.BlockSpec((nb, tk), lambda i, k: (i, k)),
                    pl.BlockSpec((Cls_pad, tk), lambda i, k: (0, k)),
                    pl.BlockSpec((1, Cls_pad), lambda i, k: (0, 0)),
                ],
                out_specs=pl.BlockSpec((nb, Cls_pad), lambda i, k: (i, 0)),
            ),
            compiler_params=pltpu.CompilerParams(
                dimension_semantics=("parallel", "arbitrary"),
                vmem_limit_bytes=vmem_limit,
            ),
        )(x_flat, w_flat, b_row)

    return out[:N, :Cls]


def reference_forward(x, weight, bias):
    # pure-JAX reference: conv2d (valid, stride 1) + flatten + sigmoid, all f32
    o = lax.conv_general_dilated(
        x, weight, window_strides=(1, 1), padding="VALID",
        dimension_numbers=("NCHW", "OIHW", "NCHW"),
    )
    o = o + bias.reshape(1, -1, 1, 1)
    o = o.reshape(o.shape[0], -1)
    return jax.nn.sigmoid(o)


if __name__ == "__main__":
    key = jax.random.PRNGKey(0)
    kx, kw, kb = jax.random.split(key, 3)

    N, Cin, Cls = 2, 4, 3
    x = jax.random.normal(kx, (N, Cin, 32, 32), dtype=jnp.float32)
    # deterministic synthetic params for Conv2d(Cin, Cls, kernel_size=32)
    fan_in = Cin * 32 * 32
    bound = 1.0 / (fan_in ** 0.5)
    weight = jax.random.uniform(kw, (Cls, Cin, 32, 32), jnp.float32, -bound, bound)
    bias = jax.random.uniform(kb, (Cls,), jnp.float32, -bound, bound)

    ref = reference_forward(x, weight, bias)

    # Path A: whole reduction resident in VMEM (single-shot kernel).
    out_a = jax.block_until_ready(cls_mode_forward(x, weight, bias))
    assert out_a.shape == (N, Cls)
    assert jnp.allclose(out_a, ref, atol=2e-2, rtol=0), (out_a, ref)

    # Path B: force the K-reduction grid (tiny VMEM budget) to exercise it too.
    out_b = jax.block_until_ready(
        cls_mode_forward(x, weight, bias, vmem_budget_bytes=1 << 20))
    assert out_b.shape == (N, Cls)
    assert jnp.allclose(out_b, ref, atol=2e-2, rtol=0), (out_b, ref)

    print("KERNEL_OK")
</pallas_src>

<mosaic_0001>
module attributes {stable_mosaic.version = 11 : i64} {
  func.func @_cls_kernel_single(%arg0: i32, %arg1: memref<16x4096xbf16, #tpu.memory_space<vmem>>, %arg2: memref<128x4096xbf16, #tpu.memory_space<vmem>>, %arg3: memref<1x128xf32, #tpu.memory_space<vmem>>, %arg4: memref<16x128xf32, #tpu.memory_space<vmem>>) attributes {dimension_semantics = [#tpu.dimension_semantics<parallel>], iteration_bounds = array<i64: 1>, scalar_prefetch = 0 : i64, scratch_operands = 0 : i64, tpu.core_type = #tpu.core_type<tc>, window_params = [{transform_indices = @transform_0, window_bounds = array<i64: 16, 4096>}, {pipeline_mode = #tpu.pipeline_mode<synchronous>, transform_indices = @transform_1, window_bounds = array<i64: 128, 4096>}, {pipeline_mode = #tpu.pipeline_mode<synchronous>, transform_indices = @transform_2, window_bounds = array<i64: 1, 128>}, {transform_indices = @transform_3, window_bounds = array<i64: 16, 128>}]} {
    %c0 = arith.constant 0 : index
    %c0_0 = arith.constant 0 : index
    %0 = vector.load %arg1[%c0, %c0_0] : memref<16x4096xbf16, #tpu.memory_space<vmem>>, vector<16x4096xbf16>
    %c0_1 = arith.constant 0 : index
    %c0_2 = arith.constant 0 : index
    %1 = vector.load %arg2[%c0_1, %c0_2] : memref<128x4096xbf16, #tpu.memory_space<vmem>>, vector<128x4096xbf16>
    %cst = arith.constant dense<0.000000e+00> : vector<16x128xf32>
    %2 = tpu.matmul %0, %1, %cst {dimension_numbers = #tpu.dot_dimension_numbers<[1], [1], [0], [0], [0, 0, 1, 0], [], []>} : vector<16x4096xbf16>, vector<128x4096xbf16>, vector<16x128xf32> -> vector<16x128xf32>
    %c0_3 = arith.constant 0 : index
    %c0_4 = arith.constant 0 : index
    %3 = vector.load %arg3[%c0_3, %c0_4] : memref<1x128xf32, #tpu.memory_space<vmem>>, vector<1x128xf32>
    %4 = vector.broadcast %3 : vector<1x128xf32> to vector<16x128xf32>
    %5 = arith.addf %2, %4 : vector<16x128xf32>
    %cst_5 = arith.constant 0.000000e+00 : f32
    %6 = vector.broadcast %cst_5 : f32 to vector<16x128xf32>
    %7 = arith.subf %6, %5 : vector<16x128xf32>
    %8 = math.exp %7 : vector<16x128xf32>
    %cst_6 = arith.constant 1.000000e+00 : f32
    %9 = vector.broadcast %cst_6 : f32 to vector<16x128xf32>
    %10 = arith.addf %9, %8 : vector<16x128xf32>
    %11 = tpu.reciprocal %10 {approx = true} : vector<16x128xf32> -> vector<16x128xf32>
    %c0_7 = arith.constant 0 : index
    %c0_8 = arith.constant 0 : index
    %12 = vector.load %arg4[%c0_7, %c0_8] : memref<16x128xf32, #tpu.memory_space<vmem>>, vector<16x128xf32>
    tpu.vector_store %arg4[%c0_7, %c0_8], %11 {strides = array<i32>} : memref<16x128xf32, #tpu.memory_space<vmem>>, vector<16x128xf32>,
    return
  }
  func.func @transform_0(%arg0: i32) -> (i32, i32) {
    %c0_i32 = arith.constant 0 : i32
    %c0_i32_0 = arith.constant 0 : i32
    return %arg0, %c0_i32 : i32, i32
  }
  func.func @transform_1(%arg0: i32) -> (i32, i32) {
    %c0_i32 = arith.constant 0 : i32
    %c0_i32_0 = arith.constant 0 : i32
    %c0_i32_1 = arith.constant 0 : i32
    return %c0_i32, %c0_i32_0 : i32, i32
  }
  func.func @transform_2(%arg0: i32) -> (i32, i32) {
    %c0_i32 = arith.constant 0 : i32
    %c0_i32_0 = arith.constant 0 : i32
    %c0_i32_1 = arith.constant 0 : i32
    return %c0_i32, %c0_i32_0 : i32, i32
  }
  func.func @transform_3(%arg0: i32) -> (i32, i32) {
    %c0_i32 = arith.constant 0 : i32
    %c0_i32_0 = arith.constant 0 : i32
    return %arg0, %c0_i32 : i32, i32
  }
}

</mosaic_0001>

<llo_original>
// kernel: tpu_custom_call.1
$region0: #{tpu_custom_call.1}
  #allocation0 [shape = 'u32[]', space=smem, size = 0x4, offset = 0x4, fixed_abs, tag = 'smem constant byte address 0x4 - core index']
  #allocation1 [shape = 'u32[144,128]{1,0:T(1,128)}', space=vmem, size = 0x12000, scoped, tag = 'internal scratch']
  %s0 = inlined_call_operand.hbm [shape: bf16[16,4096], index: 0, kind: input, shape index: {}]
  %s1 = inlined_call_operand.hbm [shape: bf16[128,4096], index: 1, kind: input, shape index: {}]
  %s2 = inlined_call_operand.vmem [shape: f32[1,128], index: 2, kind: input, shape index: {}]
  %s3 = inlined_call_operand.hbm [shape: f32[16,128], index: 3, kind: output, shape index: {}]
  %s4 = sld [smem:[#allocation0]]
  $region30: #{tpu_custom_call.1} parent=0
    _
  %s6 = ssub.s32 1, %s4
  %s7 = scalar_select 0, %s6, %s4
  $region1: #{tpu_custom_call.1} parent=0
    #allocation2 [shape = 'u8[131072]{0}', space=vmem, size = 0x20000, scoped, tag = 'input window, operand 0, single buffered']
    #allocation3 [shape = 's32[1]{0}', space=sflag, size = 0x4, scoped, tag = 'scoped memory for tpu_custom_call.1']
    #allocation4 [shape = 's32[1]{0}', space=sflag, size = 0x4, scoped, tag = 'scoped memory for tpu_custom_call.1']
    #allocation5 [shape = 'u8[1048576]{0}', space=vmem, size = 0x100000, scoped, tag = 'input window, operand 1, single buffered']
    #allocation6 [shape = 's32[1]{0}', space=sflag, size = 0x4, scoped, tag = 'scoped memory for tpu_custom_call.1']
    #allocation7 [shape = 'u8[8192]{0}', space=vmem, size = 0x2000, scoped, tag = 'output window, operand 0, single buffered']
    %8 = vsyncpa [#allocation3], 0
    %9 = vsyncpa [#allocation6], 0
    %10 = vsyncpa [#allocation4], 0
    // Predicated region
    $region2: #{tpu_custom_call.1} parent=1 // pred_check
      _
    $region3: #{tpu_custom_call.1} parent=1 // pred_check_branch
      %12 = sbr.rel (0) target = $region5
    $region4: #{tpu_custom_call.1} parent=1 // pred_region
      %s14 = ssub.s32 4096, 4096
      %15 = vsyncadd [#allocation3], %s14
      %s16 = sshll.u32 [#allocation2], 4
      %s17 = int_to_ptr.vmem [resolvable:$true] %s16
      %22 = dma.hbm_to_vmem [thread:$0]  %s0, 4096, %s17, [#allocation3], 2048, 2048, 128
    $region5: #{tpu_custom_call.1} parent=1 // pred_fallthru
      _
    // Predicated region
    $region6: #{tpu_custom_call.1} parent=1 // pred_check
      _
    $region7: #{tpu_custom_call.1} parent=1 // pred_check_branch
      %24 = sbr.rel (0) target = $region9
    $region8: #{tpu_custom_call.1} parent=1 // pred_region
      %s26 = ssub.s32 32768, 32768
      %27 = vsyncadd [#allocation6], %s26
      %s28 = sshll.u32 [#allocation5], 4
      %s29 = int_to_ptr.vmem [resolvable:$true] %s28
      %34 = dma.hbm_to_vmem [thread:$0]  %s1, 32768, %s29, [#allocation6], 2048, 2048, 128
    $region9: #{tpu_custom_call.1} parent=1 // pred_fallthru
      _
    // Predicated region
    $region10: #{tpu_custom_call.1} parent=1 // pred_check
      _
    $region11: #{tpu_custom_call.1} parent=1 // pred_check_branch
      %36 = sbr.rel (0) target = $region13
    $region12: #{tpu_custom_call.1} parent=1 // pred_region
      _
    $region13: #{tpu_custom_call.1} parent=1 // pred_fallthru
      _
    // Predicated region
    $region14: #{tpu_custom_call.1} parent=1 // pred_check
      _
    $region15: #{tpu_custom_call.1} parent=1 // pred_check_branch
      %38 = sbr.rel (0) target = $region17
    $region16: #{tpu_custom_call.1} parent=1 // pred_region
      %39 = dma.done [#allocation3], 4096
    $region17: #{tpu_custom_call.1} parent=1 // pred_fallthru
      _
    // Predicated region
    $region18: #{tpu_custom_call.1} parent=1 // pred_check
      _
    $region19: #{tpu_custom_call.1} parent=1 // pred_check_branch
      %41 = sbr.rel (0) target = $region21
    $region20: #{tpu_custom_call.1} parent=1 // pred_region
      %42 = dma.done [#allocation6], 32768
    $region21: #{tpu_custom_call.1} parent=1 // pred_fallthru
      _
    %v44 = vld [vmem:[#allocation2] sm:$0xff]
    %v45 = vld [vmem:[#allocation2 + $0x8] sm:$0xff]
    %v46 = vld [vmem:[#allocation2 + $0x10] sm:$0xff]
    %v47 = vld [vmem:[#allocation2 + $0x18] sm:$0xff]
    %v48 = vld [vmem:[#allocation2 + $0x20] sm:$0xff]
    %v49 = vld [vmem:[#allocation2 + $0x28] sm:$0xff]
    %v50 = vld [vmem:[#allocation2 + $0x30] sm:$0xff]
    %v51 = vld [vmem:[#allocation2 + $0x38] sm:$0xff]
    %v52 = vld [vmem:[#allocation2 + $0x40] sm:$0xff]
    %v53 = vld [vmem:[#allocation2 + $0x48] sm:$0xff]
    %v54 = vld [vmem:[#allocation2 + $0x50] sm:$0xff]
    %v55 = vld [vmem:[#allocation2 + $0x58] sm:$0xff]
    %v56 = vld [vmem:[#allocation2 + $0x60] sm:$0xff]
    %v57 = vld [vmem:[#allocation2 + $0x68] sm:$0xff]
    %v58 = vld [vmem:[#allocation2 + $0x70] sm:$0xff]
    %v59 = vld [vmem:[#allocation2 + $0x78] sm:$0xff]
    %v60 = vld [vmem:[#allocation2 + $0x80] sm:$0xff]
    %v61 = vld [vmem:[#allocation2 + $0x88] sm:$0xff]
    %v62 = vld [vmem:[#allocation2 + $0x90] sm:$0xff]
    %v63 = vld [vmem:[#allocation2 + $0x98] sm:$0xff]
    %v64 = vld [vmem:[#allocation2 + $0xa0] sm:$0xff]
    %v65 = vld [vmem:[#allocation2 + $0xa8] sm:$0xff]
    %v66 = vld [vmem:[#allocation2 + $0xb0] sm:$0xff]
    %v67 = vld [vmem:[#allocation2 + $0xb8] sm:$0xff]
    %v68 = vld [vmem:[#allocation2 + $0xc0] sm:$0xff]
    %v69 = vld [vmem:[#allocation2 + $0xc8] sm:$0xff]
    %v70 = vld [vmem:[#allocation2 + $0xd0] sm:$0xff]
    %v71 = vld [vmem:[#allocation2 + $0xd8] sm:$0xff]
    %v72 = vld [vmem:[#allocation2 + $0xe0] sm:$0xff]
    %v73 = vld [vmem:[#allocation2 + $0xe8] sm:$0xff]
    %v74 = vld [vmem:[#allocation2 + $0xf0] sm:$0xff]
    %v75 = vld [vmem:[#allocation2 + $0xf8] sm:$0xff]
    %v76 = vld [vmem:[#allocation5] sm:$0xff]
    %v77 = vld [vmem:[#allocation5 + $0x8] sm:$0xff]
    %v78 = vld [vmem:[#allocation5 + $0x10] sm:$0xff]
    %v79 = vld [vmem:[#allocation5 + $0x18] sm:$0xff]
    %v80 = vld [vmem:[#allocation5 + $0x20] sm:$0xff]
    %v81 = vld [vmem:[#allocation5 + $0x28] sm:$0xff]
    %v82 = vld [vmem:[#allocation5 + $0x30] sm:$0xff]
    %v83 = vld [vmem:[#allocation5 + $0x38] sm:$0xff]
    %v84 = vld [vmem:[#allocation5 + $0x40] sm:$0xff]
    %v85 = vld [vmem:[#allocation5 + $0x48] sm:$0xff]
    %v86 = vld [vmem:[#allocation5 + $0x50] sm:$0xff]
    %v87 = vld [vmem:[#allocation5 + $0x58] sm:$0xff]
    %v88 = vld [vmem:[#allocation5 + $0x60] sm:$0xff]
    %v89 = vld [vmem:[#allocation5 + $0x68] sm:$0xff]
    %v90 = vld [vmem:[#allocation5 + $0x70] sm:$0xff]
    %v91 = vld [vmem:[#allocation5 + $0x78] sm:$0xff]
    %v92 = vld [vmem:[#allocation5 + $0x80] sm:$0xff]
    %v93 = vld [vmem:[#allocation5 + $0x88] sm:$0xff]
    %v94 = vld [vmem:[#allocation5 + $0x90] sm:$0xff]
    %v95 = vld [vmem:[#allocation5 + $0x98] sm:$0xff]
    %v96 = vld [vmem:[#allocation5 + $0xa0] sm:$0xff]
    %v97 = vld [vmem:[#allocation5 + $0xa8] sm:$0xff]
    %v98 = vld [vmem:[#allocation5 + $0xb0] sm:$0xff]
    %v99 = vld [vmem:[#allocation5 + $0xb8] sm:$0xff]
    %v100 = vld [vmem:[#allocation5 + $0xc0] sm:$0xff]
    %v101 = vld [vmem:[#allocation5 + $0xc8] sm:$0xff]
    %v102 = vld [vmem:[#allocation5 + $0xd0] sm:$0xff]
    %v103 = vld [vmem:[#allocation5 + $0xd8] sm:$0xff]
    %v104 = vld [vmem:[#allocation5 + $0xe0] sm:$0xff]
    %v105 = vld [vmem:[#allocation5 + $0xe8] sm:$0xff]
    %v106 = vld [vmem:[#allocation5 + $0xf0] sm:$0xff]
    %v107 = vld [vmem:[#allocation5 + $0xf8] sm:$0xff]
    %v108 = vld [vmem:[#allocation5 + $0x100] sm:$0xff]
    %v109 = vld [vmem:[#allocation5 + $0x108] sm:$0xff]
    %v110 = vld [vmem:[#allocation5 + $0x110] sm:$0xff]
    %v111 = vld [vmem:[#allocation5 + $0x118] sm:$0xff]
    %v112 = vld [vmem:[#allocation5 + $0x120] sm:$0xff]
    %v113 = vld [vmem:[#allocation5 + $0x128] sm:$0xff]
    %v114 = vld [vmem:[#allocation5 + $0x130] sm:$0xff]
    %v115 = vld [vmem:[#allocation5 + $0x138] sm:$0xff]
    %v116 = vld [vmem:[#allocation5 + $0x140] sm:$0xff]
    %v117 = vld [vmem:[#allocation5 + $0x148] sm:$0xff]
    %v118 = vld [vmem:[#allocation5 + $0x150] sm:$0xff]
    %v119 = vld [vmem:[#allocation5 + $0x158] sm:$0xff]
    %v120 = vld [vmem:[#allocation5 + $0x160] sm:$0xff]
    %v121 = vld [vmem:[#allocation5 + $0x168] sm:$0xff]
    %v122 = vld [vmem:[#allocation5 + $0x170] sm:$0xff]
    %v123 = vld [vmem:[#allocation5 + $0x178] sm:$0xff]
    %v124 = vld [vmem:[#allocation5 + $0x180] sm:$0xff]
    %v125 = vld [vmem:[#allocation5 + $0x188] sm:$0xff]
    %v126 = vld [vmem:[#allocation5 + $0x190] sm:$0xff]
    %v127 = vld [vmem:[#allocation5 + $0x198] sm:$0xff]
    %v128 = vld [vmem:[#allocation5 + $0x1a0] sm:$0xff]
    %v129 = vld [vmem:[#allocation5 + $0x1a8] sm:$0xff]
    %v130 = vld [vmem:[#allocation5 + $0x1b0] sm:$0xff]
    %v131 = vld [vmem:[#allocation5 + $0x1b8] sm:$0xff]
    %v132 = vld [vmem:[#allocation5 + $0x1c0] sm:$0xff]
    %v133 = vld [vmem:[#allocation5 + $0x1c8] sm:$0xff]
    %v134 = vld [vmem:[#allocation5 + $0x1d0] sm:$0xff]
    %v135 = vld [vmem:[#allocation5 + $0x1d8] sm:$0xff]
    %v136 = vld [vmem:[#allocation5 + $0x1e0] sm:$0xff]
    %v137 = vld [vmem:[#allocation5 + $0x1e8] sm:$0xff]
    %v138 = vld [vmem:[#allocation5 + $0x1f0] sm:$0xff]
    %v139 = vld [vmem:[#allocation5 + $0x1f8] sm:$0xff]
    %v140 = vld [vmem:[#allocation5 + $0x200] sm:$0xff]
    %v141 = vld [vmem:[#allocation5 + $0x208] sm:$0xff]
    %v142 = vld [vmem:[#allocation5 + $0x210] sm:$0xff]
    %v143 = vld [vmem:[#allocation5 + $0x218] sm:$0xff]
    %v144 = vld [vmem:[#allocation5 + $0x220] sm:$0xff]
    %v145 = vld [vmem:[#allocation5 + $0x228] sm:$0xff]
    %v146 = vld [vmem:[#allocation5 + $0x230] sm:$0xff]
    %v147 = vld [vmem:[#allocation5 + $0x238] sm:$0xff]
    %v148 = vld [vmem:[#allocation5 + $0x240] sm:$0xff]
    %v149 = vld [vmem:[#allocation5 + $0x248] sm:$0xff]
    %v150 = vld [vmem:[#allocation5 + $0x250] sm:$0xff]
    %v151 = vld [vmem:[#allocation5 + $0x258] sm:$0xff]
    %v152 = vld [vmem:[#allocation5 + $0x260] sm:$0xff]
    %v153 = vld [vmem:[#allocation5 + $0x268] sm:$0xff]
    %v154 = vld [vmem:[#allocation5 + $0x270] sm:$0xff]
    %v155 = vld [vmem:[#allocation5 + $0x278] sm:$0xff]
    %v156 = vld [vmem:[#allocation5 + $0x280] sm:$0xff]
    %v157 = vld [vmem:[#allocation5 + $0x288] sm:$0xff]
    %v158 = vld [vmem:[#allocation5 + $0x290] sm:$0xff]
    %v159 = vld [vmem:[#allocation5 + $0x298] sm:$0xff]
    %v160 = vld [vmem:[#allocation5 + $0x2a0] sm:$0xff]
    %v161 = vld [vmem:[#allocation5 + $0x2a8] sm:$0xff]
    %v162 = vld [vmem:[#allocation5 + $0x2b0] sm:$0xff]
    %v163 = vld [vmem:[#allocation5 + $0x2b8] sm:$0xff]
    %v164 = vld [vmem:[#allocation5 + $0x2c0] sm:$0xff]
    %v165 = vld [vmem:[#allocation5 + $0x2c8] sm:$0xff]
    %v166 = vld [vmem:[#allocation5 + $0x2d0] sm:$0xff]
    %v167 = vld [vmem:[#allocation5 + $0x2d8] sm:$0xff]
    %v168 = vld [vmem:[#allocation5 + $0x2e0] sm:$0xff]
    %v169 = vld [vmem:[#allocation5 + $0x2e8] sm:$0xff]
    %v170 = vld [vmem:[#allocation5 + $0x2f0] sm:$0xff]
    %v171 = vld [vmem:[#allocation5 + $0x2f8] sm:$0xff]
    %v172 = vld [vmem:[#allocation5 + $0x300] sm:$0xff]
    %v173 = vld [vmem:[#allocation5 + $0x308] sm:$0xff]
    %v174 = vld [vmem:[#allocation5 + $0x310] sm:$0xff]
    %v175 = vld [vmem:[#allocation5 + $0x318] sm:$0xff]
    %v176 = vld [vmem:[#allocation5 + $0x320] sm:$0xff]
    %v177 = vld [vmem:[#allocation5 + $0x328] sm:$0xff]
    %v178 = vld [vmem:[#allocation5 + $0x330] sm:$0xff]
    %v179 = vld [vmem:[#allocation5 + $0x338] sm:$0xff]
    %v180 = vld [vmem:[#allocation5 + $0x340] sm:$0xff]
    %v181 = vld [vmem:[#allocation5 + $0x348] sm:$0xff]
    %v182 = vld [vmem:[#allocation5 + $0x350] sm:$0xff]
    %v183 = vld [vmem:[#allocation5 + $0x358] sm:$0xff]
    %v184 = vld [vmem:[#allocation5 + $0x360] sm:$0xff]
    %v185 = vld [vmem:[#allocation5 + $0x368] sm:$0xff]
    %v186 = vld [vmem:[#allocation5 + $0x370] sm:$0xff]
    %v187 = vld [vmem:[#allocation5 + $0x378] sm:$0xff]
    %v188 = vld [vmem:[#allocation5 + $0x380] sm:$0xff]
    %v189 = vld [vmem:[#allocation5 + $0x388] sm:$0xff]
    %v190 = vld [vmem:[#allocation5 + $0x390] sm:$0xff]
    %v191 = vld [vmem:[#allocation5 + $0x398] sm:$0xff]
    %v192 = vld [vmem:[#allocation5 + $0x3a0] sm:$0xff]
    %v193 = vld [vmem:[#allocation5 + $0x3a8] sm:$0xff]
    %v194 = vld [vmem:[#allocation5 + $0x3b0] sm:$0xff]
    %v195 = vld [vmem:[#allocation5 + $0x3b8] sm:$0xff]
    %v196 = vld [vmem:[#allocation5 + $0x3c0] sm:$0xff]
    %v197 = vld [vmem:[#allocation5 + $0x3c8] sm:$0xff]
    %v198 = vld [vmem:[#allocation5 + $0x3d0] sm:$0xff]
    %v199 = vld [vmem:[#allocation5 + $0x3d8] sm:$0xff]
    %v200 = vld [vmem:[#allocation5 + $0x3e0] sm:$0xff]
    %v201 = vld [vmem:[#allocation5 + $0x3e8] sm:$0xff]
    %v202 = vld [vmem:[#allocation5 + $0x3f0] sm:$0xff]
    %v203 = vld [vmem:[#allocation5 + $0x3f8] sm:$0xff]
    %v204 = vld [vmem:[#allocation5 + $0x400] sm:$0xff]
    %v205 = vld [vmem:[#allocation5 + $0x408] sm:$0xff]
    %v206 = vld [vmem:[#allocation5 + $0x410] sm:$0xff]
    %v207 = vld [vmem:[#allocation5 + $0x418] sm:$0xff]
    %v208 = vld [vmem:[#allocation5 + $0x420] sm:$0xff]
    %v209 = vld [vmem:[#allocation5 + $0x428] sm:$0xff]
    %v210 = vld [vmem:[#allocation5 + $0x430] sm:$0xff]
    %v211 = vld [vmem:[#allocation5 + $0x438] sm:$0xff]
    %v212 = vld [vmem:[#allocation5 + $0x440] sm:$0xff]
    %v213 = vld [vmem:[#allocation5 + $0x448] sm:$0xff]
    %v214 = vld [vmem:[#allocation5 + $0x450] sm:$0xff]
    %v215 = vld [vmem:[#allocation5 + $0x458] sm:$0xff]
    %v216 = vld [vmem:[#allocation5 + $0x460] sm:$0xff]
    %v217 = vld [vmem:[#allocation5 + $0x468] sm:$0xff]
    %v218 = vld [vmem:[#allocation5 + $0x470] sm:$0xff]
    %v219 = vld [vmem:[#allocation5 + $0x478] sm:$0xff]
    %v220 = vld [vmem:[#allocation5 + $0x480] sm:$0xff]
    %v221 = vld [vmem:[#allocation5 + $0x488] sm:$0xff]
    %v222 = vld [vmem:[#allocation5 + $0x490] sm:$0xff]
    %v223 = vld [vmem:[#allocation5 + $0x498] sm:$0xff]
    %v224 = vld [vmem:[#allocation5 + $0x4a0] sm:$0xff]
    %v225 = vld [vmem:[#allocation5 + $0x4a8] sm:$0xff]
    %v226 = vld [vmem:[#allocation5 + $0x4b0] sm:$0xff]
    %v227 = vld [vmem:[#allocation5 + $0x4b8] sm:$0xff]
    %v228 = vld [vmem:[#allocation5 + $0x4c0] sm:$0xff]
    %v229 = vld [vmem:[#allocation5 + $0x4c8] sm:$0xff]
    %v230 = vld [vmem:[#allocation5 + $0x4d0] sm:$0xff]
    %v231 = vld [vmem:[#allocation5 + $0x4d8] sm:$0xff]
    %v232 = vld [vmem:[#allocation5 + $0x4e0] sm:$0xff]
    %v233 = vld [vmem:[#allocation5 + $0x4e8] sm:$0xff]
    %v234 = vld [vmem:[#allocation5 + $0x4f0] sm:$0xff]
    %v235 = vld [vmem:[#allocation5 + $0x4f8] sm:$0xff]
    %v236 = vld [vmem:[#allocation5 + $0x500] sm:$0xff]
    %v237 = vld [vmem:[#allocation5 + $0x508] sm:$0xff]
    %v238 = vld [vmem:[#allocation5 + $0x510] sm:$0xff]
    %v239 = vld [vmem:[#allocation5 + $0x518] sm:$0xff]
    %v240 = vld [vmem:[#allocation5 + $0x520] sm:$0xff]
    %v241 = vld [vmem:[#allocation5 + $0x528] sm:$0xff]
    %v242 = vld [vmem:[#allocation5 + $0x530] sm:$0xff]
    %v243 = vld [vmem:[#allocation5 + $0x538] sm:$0xff]
    %v244 = vld [vmem:[#allocation5 + $0x540] sm:$0xff]
    %v245 = vld [vmem:[#allocation5 + $0x548] sm:$0xff]
    %v246 = vld [vmem:[#allocation5 + $0x550] sm:$0xff]
    %v247 = vld [vmem:[#allocation5 + $0x558] sm:$0xff]
    %v248 = vld [vmem:[#allocation5 + $0x560] sm:$0xff]
    %v249 = vld [vmem:[#allocation5 + $0x568] sm:$0xff]
    %v250 = vld [vmem:[#allocation5 + $0x570] sm:$0xff]
    %v251 = vld [vmem:[#allocation5 + $0x578] sm:$0xff]
    %v252 = vld [vmem:[#allocation5 + $0x580] sm:$0xff]
    %v253 = vld [vmem:[#allocation5 + $0x588] sm:$0xff]
    %v254 = vld [vmem:[#allocation5 + $0x590] sm:$0xff]
    %v255 = vld [vmem:[#allocation5 + $0x598] sm:$0xff]
    %v256 = vld [vmem:[#allocation5 + $0x5a0] sm:$0xff]
    %v257 = vld [vmem:[#allocation5 + $0x5a8] sm:$0xff]
    %v258 = vld [vmem:[#allocation5 + $0x5b0] sm:$0xff]
    %v259 = vld [vmem:[#allocation5 + $0x5b8] sm:$0xff]
    %v260 = vld [vmem:[#allocation5 + $0x5c0] sm:$0xff]
    %v261 = vld [vmem:[#allocation5 + $0x5c8] sm:$0xff]
    %v262 = vld [vmem:[#allocation5 + $0x5d0] sm:$0xff]
    %v263 = vld [vmem:[#allocation5 + $0x5d8] sm:$0xff]
    %v264 = vld [vmem:[#allocation5 + $0x5e0] sm:$0xff]
    %v265 = vld [vmem:[#allocation5 + $0x5e8] sm:$0xff]
    %v266 = vld [vmem:[#allocation5 + $0x5f0] sm:$0xff]
    %v267 = vld [vmem:[#allocation5 + $0x5f8] sm:$0xff]
    %v268 = vld [vmem:[#allocation5 + $0x600] sm:$0xff]
    %v269 = vld [vmem:[#allocation5 + $0x608] sm:$0xff]
    %v270 = vld [vmem:[#allocation5 + $0x610] sm:$0xff]
    %v271 = vld [vmem:[#allocation5 + $0x618] sm:$0xff]
    %v272 = vld [vmem:[#allocation5 + $0x620] sm:$0xff]
    %v273 = vld [vmem:[#allocation5 + $0x628] sm:$0xff]
    %v274 = vld [vmem:[#allocation5 + $0x630] sm:$0xff]
    %v275 = vld [vmem:[#allocation5 + $0x638] sm:$0xff]
    %v276 = vld [vmem:[#allocation5 + $0x640] sm:$0xff]
    %v277 = vld [vmem:[#allocation5 + $0x648] sm:$0xff]
    %v278 = vld [vmem:[#allocation5 + $0x650] sm:$0xff]
    %v279 = vld [vmem:[#allocation5 + $0x658] sm:$0xff]
    %v280 = vld [vmem:[#allocation5 + $0x660] sm:$0xff]
    %v281 = vld [vmem:[#allocation5 + $0x668] sm:$0xff]
    %v282 = vld [vmem:[#allocation5 + $0x670] sm:$0xff]
    %v283 = vld [vmem:[#allocation5 + $0x678] sm:$0xff]
    %v284 = vld [vmem:[#allocation5 + $0x680] sm:$0xff]
    %v285 = vld [vmem:[#allocation5 + $0x688] sm:$0xff]
    %v286 = vld [vmem:[#allocation5 + $0x690] sm:$0xff]
    %v287 = vld [vmem:[#allocation5 + $0x698] sm:$0xff]
    %v288 = vld [vmem:[#allocation5 + $0x6a0] sm:$0xff]
    %v289 = vld [vmem:[#allocation5 + $0x6a8] sm:$0xff]
    %v290 = vld [vmem:[#allocation5 + $0x6b0] sm:$0xff]
    %v291 = vld [vmem:[#allocation5 + $0x6b8] sm:$0xff]
    %v292 = vld [vmem:[#allocation5 + $0x6c0] sm:$0xff]
    %v293 = vld [vmem:[#allocation5 + $0x6c8] sm:$0xff]
    %v294 = vld [vmem:[#allocation5 + $0x6d0] sm:$0xff]
    %v295 = vld [vmem:[#allocation5 + $0x6d8] sm:$0xff]
    %v296 = vld [vmem:[#allocation5 + $0x6e0] sm:$0xff]
    %v297 = vld [vmem:[#allocation5 + $0x6e8] sm:$0xff]
    %v298 = vld [vmem:[#allocation5 + $0x6f0] sm:$0xff]
    %v299 = vld [vmem:[#allocation5 + $0x6f8] sm:$0xff]
    %v300 = vld [vmem:[#allocation5 + $0x700] sm:$0xff]
    %v301 = vld [vmem:[#allocation5 + $0x708] sm:$0xff]
    %v302 = vld [vmem:[#allocation5 + $0x710] sm:$0xff]
    %v303 = vld [vmem:[#allocation5 + $0x718] sm:$0xff]
    %v304 = vld [vmem:[#allocation5 + $0x720] sm:$0xff]
    %v305 = vld [vmem:[#allocation5 + $0x728] sm:$0xff]
    %v306 = vld [vmem:[#allocation5 + $0x730] sm:$0xff]
    %v307 = vld [vmem:[#allocation5 + $0x738] sm:$0xff]
    %v308 = vld [vmem:[#allocation5 + $0x740] sm:$0xff]
    %v309 = vld [vmem:[#allocation5 + $0x748] sm:$0xff]
    %v310 = vld [vmem:[#allocation5 + $0x750] sm:$0xff]
    %v311 = vld [vmem:[#allocation5 + $0x758] sm:$0xff]
    %v312 = vld [vmem:[#allocation5 + $0x760] sm:$0xff]
    %v313 = vld [vmem:[#allocation5 + $0x768] sm:$0xff]
    %v314 = vld [vmem:[#allocation5 + $0x770] sm:$0xff]
    %v315 = vld [vmem:[#allocation5 + $0x778] sm:$0xff]
    %v316 = vld [vmem:[#allocation5 + $0x780] sm:$0xff]
    %v317 = vld [vmem:[#allocation5 + $0x788] sm:$0xff]
    %v318 = vld [vmem:[#allocation5 + $0x790] sm:$0xff]
    %v319 = vld [vmem:[#allocation5 + $0x798] sm:$0xff]
    %v320 = vld [vmem:[#allocation5 + $0x7a0] sm:$0xff]
    %v321 = vld [vmem:[#allocation5 + $0x7a8] sm:$0xff]
    %v322 = vld [vmem:[#allocation5 + $0x7b0] sm:$0xff]
    %v323 = vld [vmem:[#allocation5 + $0x7b8] sm:$0xff]
    %v324 = vld [vmem:[#allocation5 + $0x7c0] sm:$0xff]
    %v325 = vld [vmem:[#allocation5 + $0x7c8] sm:$0xff]
    %v326 = vld [vmem:[#allocation5 + $0x7d0] sm:$0xff]
    %v327 = vld [vmem:[#allocation5 + $0x7d8] sm:$0xff]
    %v328 = vld [vmem:[#allocation5 + $0x7e0] sm:$0xff]
    %v329 = vld [vmem:[#allocation5 + $0x7e8] sm:$0xff]
    %v330 = vld [vmem:[#allocation5 + $0x7f0] sm:$0xff]
    %v331 = vld [vmem:[#allocation5 + $0x7f8] sm:$0xff]
    %v332 = vld [vmem:[%s2] sm:$0x1]
    %v334 = vlaneseq
    %v335 = vshrl.u32 %v334, 7
    %v336 = vsub.s32 0, %v335
    %v337 = vrot.slane %v332, %v336
    %v371 = vunpack.c.l.b16 %v44
    %v372 = vunpack.c.h.b16 %v44
    %v373 = vunpack.c.l.b16 %v45
    %v374 = vunpack.c.h.b16 %v45
    %v375 = vunpack.c.l.b16 %v46
    %v376 = vunpack.c.h.b16 %v46
    %v377 = vunpack.c.l.b16 %v47
    %v378 = vunpack.c.h.b16 %v47
    %v379 = vunpack.c.l.b16 %v48
    %v380 = vunpack.c.h.b16 %v48
    %v381 = vunpack.c.l.b16 %v49
    %v382 = vunpack.c.h.b16 %v49
    %v383 = vunpack.c.l.b16 %v50
    %v384 = vunpack.c.h.b16 %v50
    %v385 = vunpack.c.l.b16 %v51
    %v386 = vunpack.c.h.b16 %v51
    %v387 = vunpack.c.l.b16 %v52
    %v388 = vunpack.c.h.b16 %v52
    %v389 = vunpack.c.l.b16 %v53
    %v390 = vunpack.c.h.b16 %v53
    %v391 = vunpack.c.l.b16 %v54
    %v392 = vunpack.c.h.b16 %v54
    %v393 = vunpack.c.l.b16 %v55
    %v394 = vunpack.c.h.b16 %v55
    %v395 = vunpack.c.l.b16 %v56
    %v396 = vunpack.c.h.b16 %v56
    %v397 = vunpack.c.l.b16 %v57
    %v398 = vunpack.c.h.b16 %v57
    %v399 = vunpack.c.l.b16 %v58
    %v400 = vunpack.c.h.b16 %v58
    %v401 = vunpack.c.l.b16 %v59
    %v402 = vunpack.c.h.b16 %v59
    %v403 = vunpack.c.l.b16 %v60
    %v404 = vunpack.c.h.b16 %v60
    %v405 = vunpack.c.l.b16 %v61
    %v406 = vunpack.c.h.b16 %v61
    %v407 = vunpack.c.l.b16 %v62
    %v408 = vunpack.c.h.b16 %v62
    %v409 = vunpack.c.l.b16 %v63
    %v410 = vunpack.c.h.b16 %v63
    %v411 = vunpack.c.l.b16 %v64
    %v412 = vunpack.c.h.b16 %v64
    %v413 = vunpack.c.l.b16 %v65
    %v414 = vunpack.c.h.b16 %v65
    %v415 = vunpack.c.l.b16 %v66
    %v416 = vunpack.c.h.b16 %v66
    %v417 = vunpack.c.l.b16 %v67
    %v418 = vunpack.c.h.b16 %v67
    %v419 = vunpack.c.l.b16 %v68
    %v420 = vunpack.c.h.b16 %v68
    %v421 = vunpack.c.l.b16 %v69
    %v422 = vunpack.c.h.b16 %v69
    %v423 = vunpack.c.l.b16 %v70
    %v424 = vunpack.c.h.b16 %v70
    %v425 = vunpack.c.l.b16 %v71
    %v426 = vunpack.c.h.b16 %v71
    %v427 = vunpack.c.l.b16 %v72
    %v428 = vunpack.c.h.b16 %v72
    %v429 = vunpack.c.l.b16 %v73
    %v430 = vunpack.c.h.b16 %v73
    %v431 = vunpack.c.l.b16 %v74
    %v432 = vunpack.c.h.b16 %v74
    %v433 = vunpack.c.l.b16 %v75
    %v434 = vunpack.c.h.b16 %v75
    %v435 = vpack.c.b16 %v403, %v371
    %v436 = vpack.c.b16 %v404, %v372
    %v437 = vpack.c.b16 %v405, %v373
    %v438 = vpack.c.b16 %v406, %v374
    %v439 = vpack.c.b16 %v407, %v375
    %v440 = vpack.c.b16 %v408, %v376
    %v441 = vpack.c.b16 %v409, %v377
    %v442 = vpack.c.b16 %v410, %v378
    %v443 = vpack.c.b16 %v411, %v379
    %v444 = vpack.c.b16 %v412, %v380
    %v445 = vpack.c.b16 %v413, %v381
    %v446 = vpack.c.b16 %v414, %v382
    %v447 = vpack.c.b16 %v415, %v383
    %v448 = vpack.c.b16 %v416, %v384
    %v449 = vpack.c.b16 %v417, %v385
    %v450 = vpack.c.b16 %v418, %v386
    %v451 = vpack.c.b16 %v419, %v387
    %v452 = vpack.c.b16 %v420, %v388
    %v453 = vpack.c.b16 %v421, %v389
    %v454 = vpack.c.b16 %v422, %v390
    %v455 = vpack.c.b16 %v423, %v391
    %v456 = vpack.c.b16 %v424, %v392
    %v457 = vpack.c.b16 %v425, %v393
    %v458 = vpack.c.b16 %v426, %v394
    %v459 = vpack.c.b16 %v427, %v395
    %v460 = vpack.c.b16 %v428, %v396
    %v461 = vpack.c.b16 %v429, %v397
    %v462 = vpack.c.b16 %v430, %v398
    %v463 = vpack.c.b16 %v431, %v399
    %v464 = vpack.c.b16 %v432, %v400
    %v465 = vpack.c.b16 %v433, %v401
    %v466 = vpack.c.b16 %v434, %v402
    %v755 = vunpack.c.l.b16 %v76
    %v756 = vunpack.c.h.b16 %v76
    %v757 = vunpack.c.l.b16 %v77
    %v758 = vunpack.c.h.b16 %v77
    %v759 = vunpack.c.l.b16 %v78
    %v760 = vunpack.c.h.b16 %v78
    %v761 = vunpack.c.l.b16 %v79
    %v762 = vunpack.c.h.b16 %v79
    %v763 = vunpack.c.l.b16 %v80
    %v764 = vunpack.c.h.b16 %v80
    %v765 = vunpack.c.l.b16 %v81
    %v766 = vunpack.c.h.b16 %v81
    %v767 = vunpack.c.l.b16 %v82
    %v768 = vunpack.c.h.b16 %v82
    %v769 = vunpack.c.l.b16 %v83
    %v770 = vunpack.c.h.b16 %v83
    %v771 = vunpack.c.l.b16 %v84
    %v772 = vunpack.c.h.b16 %v84
    %v773 = vunpack.c.l.b16 %v85
    %v774 = vunpack.c.h.b16 %v85
    %v775 = vunpack.c.l.b16 %v86
    %v776 = vunpack.c.h.b16 %v86
    %v777 = vunpack.c.l.b16 %v87
    %v778 = vunpack.c.h.b16 %v87
    %v779 = vunpack.c.l.b16 %v88
    %v780 = vunpack.c.h.b16 %v88
    %v781 = vunpack.c.l.b16 %v89
    %v782 = vunpack.c.h.b16 %v89
    %v783 = vunpack.c.l.b16 %v90
    %v784 = vunpack.c.h.b16 %v90
    %v785 = vunpack.c.l.b16 %v91
    %v786 = vunpack.c.h.b16 %v91
    %v787 = vunpack.c.l.b16 %v92
    %v788 = vunpack.c.h.b16 %v92
    %v789 = vunpack.c.l.b16 %v93
    %v790 = vunpack.c.h.b16 %v93
    %v791 = vunpack.c.l.b16 %v94
    %v792 = vunpack.c.h.b16 %v94
    %v793 = vunpack.c.l.b16 %v95
    %v794 = vunpack.c.h.b16 %v95
    %v795 = vunpack.c.l.b16 %v96
    %v796 = vunpack.c.h.b16 %v96
    %v797 = vunpack.c.l.b16 %v97
    %v798 = vunpack.c.h.b16 %v97
    %v799 = vunpack.c.l.b16 %v98
    %v800 = vunpack.c.h.b16 %v98
    %v801 = vunpack.c.l.b16 %v99
    %v802 = vunpack.c.h.b16 %v99
    %v803 = vunpack.c.l.b16 %v100
    %v804 = vunpack.c.h.b16 %v100
    %v805 = vunpack.c.l.b16 %v101
    %v806 = vunpack.c.h.b16 %v101
    %v807 = vunpack.c.l.b16 %v102
    %v808 = vunpack.c.h.b16 %v102
    %v809 = vunpack.c.l.b16 %v103
    %v810 = vunpack.c.h.b16 %v103
    %v811 = vunpack.c.l.b16 %v104
    %v812 = vunpack.c.h.b16 %v104
    %v813 = vunpack.c.l.b16 %v105
    %v814 = vunpack.c.h.b16 %v105
    %v815 = vunpack.c.l.b16 %v106
    %v816 = vunpack.c.h.b16 %v106
    %v817 = vunpack.c.l.b16 %v107
    %v818 = vunpack.c.h.b16 %v107
    %v819 = vunpack.c.l.b16 %v108
    %v820 = vunpack.c.h.b16 %v108
    %v821 = vunpack.c.l.b16 %v109
    %v822 = vunpack.c.h.b16 %v109
    %v823 = vunpack.c.l.b16 %v110
    %v824 = vunpack.c.h.b16 %v110
    %v825 = vunpack.c.l.b16 %v111
    %v826 = vunpack.c.h.b16 %v111
    %v827 = vunpack.c.l.b16 %v112
    %v828 = vunpack.c.h.b16 %v112
    %v829 = vunpack.c.l.b16 %v113
    %v830 = vunpack.c.h.b16 %v113
    %v831 = vunpack.c.l.b16 %v114
    %v832 = vunpack.c.h.b16 %v114
    %v833 = vunpack.c.l.b16 %v115
    %v834 = vunpack.c.h.b16 %v115
    %v835 = vunpack.c.l.b16 %v116
    %v836 = vunpack.c.h.b16 %v116
    %v837 = vunpack.c.l.b16 %v117
    %v838 = vunpack.c.h.b16 %v117
    %v839 = vunpack.c.l.b16 %v118
    %v840 = vunpack.c.h.b16 %v118
    %v841 = vunpack.c.l.b16 %v119
    %v842 = vunpack.c.h.b16 %v119
    %v843 = vunpack.c.l.b16 %v120
    %v844 = vunpack.c.h.b16 %v120
    %v845 = vunpack.c.l.b16 %v121
    %v846 = vunpack.c.h.b16 %v121
    %v847 = vunpack.c.l.b16 %v122
    %v848 = vunpack.c.h.b16 %v122
    %v849 = vunpack.c.l.b16 %v123
    %v850 = vunpack.c.h.b16 %v123
    %v851 = vunpack.c.l.b16 %v124
    %v852 = vunpack.c.h.b16 %v124
    %v853 = vunpack.c.l.b16 %v125
    %v854 = vunpack.c.h.b16 %v125
    %v855 = vunpack.c.l.b16 %v126
    %v856 = vunpack.c.h.b16 %v126
    %v857 = vunpack.c.l.b16 %v127
    %v858 = vunpack.c.h.b16 %v127
    %v859 = vunpack.c.l.b16 %v128
    %v860 = vunpack.c.h.b16 %v128
    %v861 = vunpack.c.l.b16 %v129
    %v862 = vunpack.c.h.b16 %v129
    %v863 = vunpack.c.l.b16 %v130
    %v864 = vunpack.c.h.b16 %v130
    %v865 = vunpack.c.l.b16 %v131
    %v866 = vunpack.c.h.b16 %v131
    %v867 = vunpack.c.l.b16 %v132
    %v868 = vunpack.c.h.b16 %v132
    %v869 = vunpack.c.l.b16 %v133
    %v870 = vunpack.c.h.b16 %v133
    %v871 = vunpack.c.l.b16 %v134
    %v872 = vunpack.c.h.b16 %v134
    %v873 = vunpack.c.l.b16 %v135
    %v874 = vunpack.c.h.b16 %v135
    %v875 = vunpack.c.l.b16 %v136
    %v876 = vunpack.c.h.b16 %v136
    %v877 = vunpack.c.l.b16 %v137
    %v878 = vunpack.c.h.b16 %v137
    %v879 = vunpack.c.l.b16 %v138
    %v880 = vunpack.c.h.b16 %v138
    %v881 = vunpack.c.l.b16 %v139
    %v882 = vunpack.c.h.b16 %v139
    %v883 = vunpack.c.l.b16 %v140
    %v884 = vunpack.c.h.b16 %v140
    %v885 = vunpack.c.l.b16 %v141
    %v886 = vunpack.c.h.b16 %v141
    %v887 = vunpack.c.l.b16 %v142
    %v888 = vunpack.c.h.b16 %v142
    %v889 = vunpack.c.l.b16 %v143
    %v890 = vunpack.c.h.b16 %v143
    %v891 = vunpack.c.l.b16 %v144
    %v892 = vunpack.c.h.b16 %v144
    %v893 = vunpack.c.l.b16 %v145
    %v894 = vunpack.c.h.b16 %v145
    %v895 = vunpack.c.l.b16 %v146
    %v896 = vunpack.c.h.b16 %v146
    %v897 = vunpack.c.l.b16 %v147
    %v898 = vunpack.c.h.b16 %v147
    %v899 = vunpack.c.l.b16 %v148
    %v900 = vunpack.c.h.b16 %v148
    %v901 = vunpack.c.l.b16 %v149
    %v902 = vunpack.c.h.b16 %v149
    %v903 = vunpack.c.l.b16 %v150
    %v904 = vunpack.c.h.b16 %v150
    %v905 = vunpack.c.l.b16 %v151
    %v906 = vunpack.c.h.b16 %v151
    %v907 = vunpack.c.l.b16 %v152
    %v908 = vunpack.c.h.b16 %v152
    %v909 = vunpack.c.l.b16 %v153
    %v910 = vunpack.c.h.b16 %v153
    %v911 = vunpack.c.l.b16 %v154
    %v912 = vunpack.c.h.b16 %v154
    %v913 = vunpack.c.l.b16 %v155
    %v914 = vunpack.c.h.b16 %v155
    %v915 = vunpack.c.l.b16 %v156
    %v916 = vunpack.c.h.b16 %v156
    %v917 = vunpack.c.l.b16 %v157
    %v918 = vunpack.c.h.b16 %v157
    %v919 = vunpack.c.l.b16 %v158
    %v920 = vunpack.c.h.b16 %v158
    %v921 = vunpack.c.l.b16 %v159
    %v922 = vunpack.c.h.b16 %v159
    %v923 = vunpack.c.l.b16 %v160
    %v924 = vunpack.c.h.b16 %v160
    %v925 = vunpack.c.l.b16 %v161
    %v926 = vunpack.c.h.b16 %v161
    %v927 = vunpack.c.l.b16 %v162
    %v928 = vunpack.c.h.b16 %v162
    %v929 = vunpack.c.l.b16 %v163
    %v930 = vunpack.c.h.b16 %v163
    %v931 = vunpack.c.l.b16 %v164
    %v932 = vunpack.c.h.b16 %v164
    %v933 = vunpack.c.l.b16 %v165
    %v934 = vunpack.c.h.b16 %v165
    %v935 = vunpack.c.l.b16 %v166
    %v936 = vunpack.c.h.b16 %v166
    %v937 = vunpack.c.l.b16 %v167
    %v938 = vunpack.c.h.b16 %v167
    %v939 = vunpack.c.l.b16 %v168
    %v940 = vunpack.c.h.b16 %v168
    %v941 = vunpack.c.l.b16 %v169
    %v942 = vunpack.c.h.b16 %v169
    %v943 = vunpack.c.l.b16 %v170
    %v944 = vunpack.c.h.b16 %v170
    %v945 = vunpack.c.l.b16 %v171
    %v946 = vunpack.c.h.b16 %v171
    %v947 = vunpack.c.l.b16 %v172
    %v948 = vunpack.c.h.b16 %v172
    %v949 = vunpack.c.l.b16 %v173
    %v950 = vunpack.c.h.b16 %v173
    %v951 = vunpack.c.l.b16 %v174
    %v952 = vunpack.c.h.b16 %v174
    %v953 = vunpack.c.l.b16 %v175
    %v954 = vunpack.c.h.b16 %v175
    %v955 = vunpack.c.l.b16 %v176
    %v956 = vunpack.c.h.b16 %v176
    %v957 = vunpack.c.l.b16 %v177
    %v958 = vunpack.c.h.b16 %v177
    %v959 = vunpack.c.l.b16 %v178
    %v960 = vunpack.c.h.b16 %v178
    %v961 = vunpack.c.l.b16 %v179
    %v962 = vunpack.c.h.b16 %v179
    %v963 = vunpack.c.l.b16 %v180
    %v964 = vunpack.c.h.b16 %v180
    %v965 = vunpack.c.l.b16 %v181
    %v966 = vunpack.c.h.b16 %v181
    %v967 = vunpack.c.l.b16 %v182
    %v968 = vunpack.c.h.b16 %v182
    %v969 = vunpack.c.l.b16 %v183
    %v970 = vunpack.c.h.b16 %v183
    %v971 = vunpack.c.l.b16 %v184
    %v972 = vunpack.c.h.b16 %v184
    %v973 = vunpack.c.l.b16 %v185
    %v974 = vunpack.c.h.b16 %v185
    %v975 = vunpack.c.l.b16 %v186
    %v976 = vunpack.c.h.b16 %v186
    %v977 = vunpack.c.l.b16 %v187
    %v978 = vunpack.c.h.b16 %v187
    %v979 = vunpack.c.l.b16 %v188
    %v980 = vunpack.c.h.b16 %v188
    %v981 = vunpack.c.l.b16 %v189
    %v982 = vunpack.c.h.b16 %v189
    %v983 = vunpack.c.l.b16 %v190
    %v984 = vunpack.c.h.b16 %v190
    %v985 = vunpack.c.l.b16 %v191
    %v986 = vunpack.c.h.b16 %v191
    %v987 = vunpack.c.l.b16 %v192
    %v988 = vunpack.c.h.b16 %v192
    %v989 = vunpack.c.l.b16 %v193
    %v990 = vunpack.c.h.b16 %v193
    %v991 = vunpack.c.l.b16 %v194
    %v992 = vunpack.c.h.b16 %v194
    %v993 = vunpack.c.l.b16 %v195
    %v994 = vunpack.c.h.b16 %v195
    %v995 = vunpack.c.l.b16 %v196
    %v996 = vunpack.c.h.b16 %v196
    %v997 = vunpack.c.l.b16 %v197
    %v998 = vunpack.c.h.b16 %v197
    %v999 = vunpack.c.l.b16 %v198
    %v1000 = vunpack.c.h.b16 %v198
    %v1001 = vunpack.c.l.b16 %v199
    %v1002 = vunpack.c.h.b16 %v199
    %v1003 = vunpack.c.l.b16 %v200
    %v1004 = vunpack.c.h.b16 %v200
    %v1005 = vunpack.c.l.b16 %v201
    %v1006 = vunpack.c.h.b16 %v201
    %v1007 = vunpack.c.l.b16 %v202
    %v1008 = vunpack.c.h.b16 %v202
    %v1009 = vunpack.c.l.b16 %v203
    %v1010 = vunpack.c.h.b16 %v203
    %v1011 = vunpack.c.l.b16 %v204
    %v1012 = vunpack.c.h.b16 %v204
    %v1013 = vunpack.c.l.b16 %v205
    %v1014 = vunpack.c.h.b16 %v205
    %v1015 = vunpack.c.l.b16 %v206
    %v1016 = vunpack.c.h.b16 %v206
    %v1017 = vunpack.c.l.b16 %v207
    %v1018 = vunpack.c.h.b16 %v207
    %v1019 = vunpack.c.l.b16 %v208
    %v1020 = vunpack.c.h.b16 %v208
    %v1021 = vunpack.c.l.b16 %v209
    %v1022 = vunpack.c.h.b16 %v209
    %v1023 = vunpack.c.l.b16 %v210
    %v1024 = vunpack.c.h.b16 %v210
    %v1025 = vunpack.c.l.b16 %v211
    %v1026 = vunpack.c.h.b16 %v211
    %v1027 = vunpack.c.l.b16 %v212
    %v1028 = vunpack.c.h.b16 %v212
    %v1029 = vunpack.c.l.b16 %v213
    %v1030 = vunpack.c.h.b16 %v213
    %v1031 = vunpack.c.l.b16 %v214
    %v1032 = vunpack.c.h.b16 %v214
    %v1033 = vunpack.c.l.b16 %v215
    %v1034 = vunpack.c.h.b16 %v215
    %v1035 = vunpack.c.l.b16 %v216
    %v1036 = vunpack.c.h.b16 %v216
    %v1037 = vunpack.c.l.b16 %v217
    %v1038 = vunpack.c.h.b16 %v217
    %v1039 = vunpack.c.l.b16 %v218
    %v1040 = vunpack.c.h.b16 %v218
    %v1041 = vunpack.c.l.b16 %v219
    %v1042 = vunpack.c.h.b16 %v219
    %v1043 = vunpack.c.l.b16 %v220
    %v1044 = vunpack.c.h.b16 %v220
    %v1045 = vunpack.c.l.b16 %v221
    %v1046 = vunpack.c.h.b16 %v221
    %v1047 = vunpack.c.l.b16 %v222
    %v1048 = vunpack.c.h.b16 %v222
    %v1049 = vunpack.c.l.b16 %v223
    %v1050 = vunpack.c.h.b16 %v223
    %v1051 = vunpack.c.l.b16 %v224
    %v1052 = vunpack.c.h.b16 %v224
    %v1053 = vunpack.c.l.b16 %v225
    %v1054 = vunpack.c.h.b16 %v225
    %v1055 = vunpack.c.l.b16 %v226
    %v1056 = vunpack.c.h.b16 %v226
    %v1057 = vunpack.c.l.b16 %v227
    %v1058 = vunpack.c.h.b16 %v227
    %v1059 = vunpack.c.l.b16 %v228
    %v1060 = vunpack.c.h.b16 %v228
    %v1061 = vunpack.c.l.b16 %v229
    %v1062 = vunpack.c.h.b16 %v229
    %v1063 = vunpack.c.l.b16 %v230
    %v1064 = vunpack.c.h.b16 %v230
    %v1065 = vunpack.c.l.b16 %v231
    %v1066 = vunpack.c.h.b16 %v231
    %v1067 = vunpack.c.l.b16 %v232
    %v1068 = vunpack.c.h.b16 %v232
    %v1069 = vunpack.c.l.b16 %v233
    %v1070 = vunpack.c.h.b16 %v233
    %v1071 = vunpack.c.l.b16 %v234
    %v1072 = vunpack.c.h.b16 %v234
    %v1073 = vunpack.c.l.b16 %v235
    %v1074 = vunpack.c.h.b16 %v235
    %v1075 = vunpack.c.l.b16 %v236
    %v1076 = vunpack.c.h.b16 %v236
    %v1077 = vunpack.c.l.b16 %v237
    %v1078 = vunpack.c.h.b16 %v237
    %v1079 = vunpack.c.l.b16 %v238
    %v1080 = vunpack.c.h.b16 %v238
    %v1081 = vunpack.c.l.b16 %v239
    %v1082 = vunpack.c.h.b16 %v239
    %v1083 = vunpack.c.l.b16 %v240
    %v1084 = vunpack.c.h.b16 %v240
    %v1085 = vunpack.c.l.b16 %v241
    %v1086 = vunpack.c.h.b16 %v241
    %v1087 = vunpack.c.l.b16 %v242
    %v1088 = vunpack.c.h.b16 %v242
    %v1089 = vunpack.c.l.b16 %v243
    %v1090 = vunpack.c.h.b16 %v243
    %v1091 = vunpack.c.l.b16 %v244
    %v1092 = vunpack.c.h.b16 %v244
    %v1093 = vunpack.c.l.b16 %v245
    %v1094 = vunpack.c.h.b16 %v245
    %v1095 = vunpack.c.l.b16 %v246
    %v1096 = vunpack.c.h.b16 %v246
    %v1097 = vunpack.c.l.b16 %v247
    %v1098 = vunpack.c.h.b16 %v247
    %v1099 = vunpack.c.l.b16 %v248
    %v1100 = vunpack.c.h.b16 %v248
    %v1101 = vunpack.c.l.b16 %v249
    %v1102 = vunpack.c.h.b16 %v249
    %v1103 = vunpack.c.l.b16 %v250
    %v1104 = vunpack.c.h.b16 %v250
    %v1105 = vunpack.c.l.b16 %v251
    %v1106 = vunpack.c.h.b16 %v251
    %v1107 = vunpack.c.l.b16 %v252
    %v1108 = vunpack.c.h.b16 %v252
    %v1109 = vunpack.c.l.b16 %v253
    %v1110 = vunpack.c.h.b16 %v253
    %v1111 = vunpack.c.l.b16 %v254
    %v1112 = vunpack.c.h.b16 %v254
    %v1113 = vunpack.c.l.b16 %v255
    %v1114 = vunpack.c.h.b16 %v255
    %v1115 = vunpack.c.l.b16 %v256
    %v1116 = vunpack.c.h.b16 %v256
    %v1117 = vunpack.c.l.b16 %v257
    %v1118 = vunpack.c.h.b16 %v257
    %v1119 = vunpack.c.l.b16 %v258
    %v1120 = vunpack.c.h.b16 %v258
    %v1121 = vunpack.c.l.b16 %v259
    %v1122 = vunpack.c.h.b16 %v259
    %v1123 = vunpack.c.l.b16 %v260
    %v1124 = vunpack.c.h.b16 %v260
    %v1125 = vunpack.c.l.b16 %v261
    %v1126 = vunpack.c.h.b16 %v261
    %v1127 = vunpack.c.l.b16 %v262
    %v1128 = vunpack.c.h.b16 %v262
    %v1129 = vunpack.c.l.b16 %v263
    %v1130 = vunpack.c.h.b16 %v263
    %v1131 = vunpack.c.l.b16 %v264
    %v1132 = vunpack.c.h.b16 %v264
    %v1133 = vunpack.c.l.b16 %v265
    %v1134 = vunpack.c.h.b16 %v265
    %v1135 = vunpack.c.l.b16 %v266
    %v1136 = vunpack.c.h.b16 %v266
    %v1137 = vunpack.c.l.b16 %v267
    %v1138 = vunpack.c.h.b16 %v267
    %v1139 = vunpack.c.l.b16 %v268
    %v1140 = vunpack.c.h.b16 %v268
    %v1141 = vunpack.c.l.b16 %v269
    %v1142 = vunpack.c.h.b16 %v269
    %v1143 = vunpack.c.l.b16 %v270
    %v1144 = vunpack.c.h.b16 %v270
    %v1145 = vunpack.c.l.b16 %v271
    %v1146 = vunpack.c.h.b16 %v271
    %v1147 = vunpack.c.l.b16 %v272
    %v1148 = vunpack.c.h.b16 %v272
    %v1149 = vunpack.c.l.b16 %v273
    %v1150 = vunpack.c.h.b16 %v273
    %v1151 = vunpack.c.l.b16 %v274
    %v1152 = vunpack.c.h.b16 %v274
    %v1153 = vunpack.c.l.b16 %v275
    %v1154 = vunpack.c.h.b16 %v275
    %v1155 = vunpack.c.l.b16 %v276
    %v1156 = vunpack.c.h.b16 %v276
    %v1157 = vunpack.c.l.b16 %v277
    %v1158 = vunpack.c.h.b16 %v277
    %v1159 = vunpack.c.l.b16 %v278
    %v1160 = vunpack.c.h.b16 %v278
    %v1161 = vunpack.c.l.b16 %v279
    %v1162 = vunpack.c.h.b16 %v279
    %v1163 = vunpack.c.l.b16 %v280
    %v1164 = vunpack.c.h.b16 %v280
    %v1165 = vunpack.c.l.b16 %v281
    %v1166 = vunpack.c.h.b16 %v281
    %v1167 = vunpack.c.l.b16 %v282
    %v1168 = vunpack.c.h.b16 %v282
    %v1169 = vunpack.c.l.b16 %v283
    %v1170 = vunpack.c.h.b16 %v283
    %v1171 = vunpack.c.l.b16 %v284
    %v1172 = vunpack.c.h.b16 %v284
    %v1173 = vunpack.c.l.b16 %v285
    %v1174 = vunpack.c.h.b16 %v285
    %v1175 = vunpack.c.l.b16 %v286
    %v1176 = vunpack.c.h.b16 %v286
    %v1177 = vunpack.c.l.b16 %v287
    %v1178 = vunpack.c.h.b16 %v287
    %v1179 = vunpack.c.l.b16 %v288
    %v1180 = vunpack.c.h.b16 %v288
    %v1181 = vunpack.c.l.b16 %v289
    %v1182 = vunpack.c.h.b16 %v289
    %v1183 = vunpack.c.l.b16 %v290
    %v1184 = vunpack.c.h.b16 %v290
    %v1185 = vunpack.c.l.b16 %v291
    %v1186 = vunpack.c.h.b16 %v291
    %v1187 = vunpack.c.l.b16 %v292
    %v1188 = vunpack.c.h.b16 %v292
    %v1189 = vunpack.c.l.b16 %v293
    %v1190 = vunpack.c.h.b16 %v293
    %v1191 = vunpack.c.l.b16 %v294
    %v1192 = vunpack.c.h.b16 %v294
    %v1193 = vunpack.c.l.b16 %v295
    %v1194 = vunpack.c.h.b16 %v295
    %v1195 = vunpack.c.l.b16 %v296
    %v1196 = vunpack.c.h.b16 %v296
    %v1197 = vunpack.c.l.b16 %v297
    %v1198 = vunpack.c.h.b16 %v297
    %v1199 = vunpack.c.l.b16 %v298
    %v1200 = vunpack.c.h.b16 %v298
    %v1201 = vunpack.c.l.b16 %v299
    %v1202 = vunpack.c.h.b16 %v299
    %v1203 = vunpack.c.l.b16 %v300
    %v1204 = vunpack.c.h.b16 %v300
    %v1205 = vunpack.c.l.b16 %v301
    %v1206 = vunpack.c.h.b16 %v301
    %v1207 = vunpack.c.l.b16 %v302
    %v1208 = vunpack.c.h.b16 %v302
    %v1209 = vunpack.c.l.b16 %v303
    %v1210 = vunpack.c.h.b16 %v303
    %v1211 = vunpack.c.l.b16 %v304
    %v1212 = vunpack.c.h.b16 %v304
    %v1213 = vunpack.c.l.b16 %v305
    %v1214 = vunpack.c.h.b16 %v305
    %v1215 = vunpack.c.l.b16 %v306
    %v1216 = vunpack.c.h.b16 %v306
    %v1217 = vunpack.c.l.b16 %v307
    %v1218 = vunpack.c.h.b16 %v307
    %v1219 = vunpack.c.l.b16 %v308
    %v1220 = vunpack.c.h.b16 %v308
    %v1221 = vunpack.c.l.b16 %v309
    %v1222 = vunpack.c.h.b16 %v309
    %v1223 = vunpack.c.l.b16 %v310
    %v1224 = vunpack.c.h.b16 %v310
    %v1225 = vunpack.c.l.b16 %v311
    %v1226 = vunpack.c.h.b16 %v311
    %v1227 = vunpack.c.l.b16 %v312
    %v1228 = vunpack.c.h.b16 %v312
    %v1229 = vunpack.c.l.b16 %v313
    %v1230 = vunpack.c.h.b16 %v313
    %v1231 = vunpack.c.l.b16 %v314
    %v1232 = vunpack.c.h.b16 %v314
    %v1233 = vunpack.c.l.b16 %v315
    %v1234 = vunpack.c.h.b16 %v315
    %v1235 = vunpack.c.l.b16 %v316
    %v1236 = vunpack.c.h.b16 %v316
    %v1237 = vunpack.c.l.b16 %v317
    %v1238 = vunpack.c.h.b16 %v317
    %v1239 = vunpack.c.l.b16 %v318
    %v1240 = vunpack.c.h.b16 %v318
    %v1241 = vunpack.c.l.b16 %v319
    %v1242 = vunpack.c.h.b16 %v319
    %v1243 = vunpack.c.l.b16 %v320
    %v1244 = vunpack.c.h.b16 %v320
    %v1245 = vunpack.c.l.b16 %v321
    %v1246 = vunpack.c.h.b16 %v321
    %v1247 = vunpack.c.l.b16 %v322
    %v1248 = vunpack.c.h.b16 %v322
    %v1249 = vunpack.c.l.b16 %v323
    %v1250 = vunpack.c.h.b16 %v323
    %v1251 = vunpack.c.l.b16 %v324
    %v1252 = vunpack.c.h.b16 %v324
    %v1253 = vunpack.c.l.b16 %v325
    %v1254 = vunpack.c.h.b16 %v325
    %v1255 = vunpack.c.l.b16 %v326
    %v1256 = vunpack.c.h.b16 %v326
    %v1257 = vunpack.c.l.b16 %v327
    %v1258 = vunpack.c.h.b16 %v327
    %v1259 = vunpack.c.l.b16 %v328
    %v1260 = vunpack.c.h.b16 %v328
    %v1261 = vunpack.c.l.b16 %v329
    %v1262 = vunpack.c.h.b16 %v329
    %v1263 = vunpack.c.l.b16 %v330
    %v1264 = vunpack.c.h.b16 %v330
    %v1265 = vunpack.c.l.b16 %v331
    %v1266 = vunpack.c.h.b16 %v331
    %v1267 = vpack.c.b16 %v787, %v755
    %v1268 = vpack.c.b16 %v788, %v756
    %v1269 = vpack.c.b16 %v789, %v757
    %v1270 = vpack.c.b16 %v790, %v758
    %v1271 = vpack.c.b16 %v791, %v759
    %v1272 = vpack.c.b16 %v792, %v760
    %v1273 = vpack.c.b16 %v793, %v761
    %v1274 = vpack.c.b16 %v794, %v762
    %v1275 = vpack.c.b16 %v795, %v763
    %v1276 = vpack.c.b16 %v796, %v764
    %v1277 = vpack.c.b16 %v797, %v765
    %v1278 = vpack.c.b16 %v798, %v766
    %v1279 = vpack.c.b16 %v799, %v767
    %v1280 = vpack.c.b16 %v800, %v768
    %v1281 = vpack.c.b16 %v801, %v769
    %v1282 = vpack.c.b16 %v802, %v770
    %v1283 = vpack.c.b16 %v803, %v771
    %v1284 = vpack.c.b16 %v804, %v772
    %v1285 = vpack.c.b16 %v805, %v773
    %v1286 = vpack.c.b16 %v806, %v774
    %v1287 = vpack.c.b16 %v807, %v775
    %v1288 = vpack.c.b16 %v808, %v776
    %v1289 = vpack.c.b16 %v809, %v777
    %v1290 = vpack.c.b16 %v810, %v778
    %v1291 = vpack.c.b16 %v811, %v779
    %v1292 = vpack.c.b16 %v812, %v780
    %v1293 = vpack.c.b16 %v813, %v781
    %v1294 = vpack.c.b16 %v814, %v782
    %v1295 = vpack.c.b16 %v815, %v783
    %v1296 = vpack.c.b16 %v816, %v784
    %v1297 = vpack.c.b16 %v817, %v785
    %v1298 = vpack.c.b16 %v818, %v786
    %v1299 = vpack.c.b16 %v851, %v819
    %v1300 = vpack.c.b16 %v852, %v820
    %v1301 = vpack.c.b16 %v853, %v821
    %v1302 = vpack.c.b16 %v854, %v822
    %v1303 = vpack.c.b16 %v855, %v823
    %v1304 = vpack.c.b16 %v856, %v824
    %v1305 = vpack.c.b16 %v857, %v825
    %v1306 = vpack.c.b16 %v858, %v826
    %v1307 = vpack.c.b16 %v859, %v827
    %v1308 = vpack.c.b16 %v860, %v828
    %v1309 = vpack.c.b16 %v861, %v829
    %v1310 = vpack.c.b16 %v862, %v830
    %v1311 = vpack.c.b16 %v863, %v831
    %v1312 = vpack.c.b16 %v864, %v832
    %v1313 = vpack.c.b16 %v865, %v833
    %v1314 = vpack.c.b16 %v866, %v834
    %v1315 = vpack.c.b16 %v867, %v835
    %v1316 = vpack.c.b16 %v868, %v836
    %v1317 = vpack.c.b16 %v869, %v837
    %v1318 = vpack.c.b16 %v870, %v838
    %v1319 = vpack.c.b16 %v871, %v839
    %v1320 = vpack.c.b16 %v872, %v840
    %v1321 = vpack.c.b16 %v873, %v841
    %v1322 = vpack.c.b16 %v874, %v842
    %v1323 = vpack.c.b16 %v875, %v843
    %v1324 = vpack.c.b16 %v876, %v844
    %v1325 = vpack.c.b16 %v877, %v845
    %v1326 = vpack.c.b16 %v878, %v846
    %v1327 = vpack.c.b16 %v879, %v847
    %v1328 = vpack.c.b16 %v880, %v848
    %v1329 = vpack.c.b16 %v881, %v849
    %v1330 = vpack.c.b16 %v882, %v850
    %v1331 = vpack.c.b16 %v915, %v883
    %v1332 = vpack.c.b16 %v916, %v884
    %v1333 = vpack.c.b16 %v917, %v885
    %v1334 = vpack.c.b16 %v918, %v886
    %v1335 = vpack.c.b16 %v919, %v887
    %v1336 = vpack.c.b16 %v920, %v888
    %v1337 = vpack.c.b16 %v921, %v889
    %v1338 = vpack.c.b16 %v922, %v890
    %v1339 = vpack.c.b16 %v923, %v891
    %v1340 = vpack.c.b16 %v924, %v892
    %v1341 = vpack.c.b16 %v925, %v893
    %v1342 = vpack.c.b16 %v926, %v894
    %v1343 = vpack.c.b16 %v927, %v895
    %v1344 = vpack.c.b16 %v928, %v896
    %v1345 = vpack.c.b16 %v929, %v897
    %v1346 = vpack.c.b16 %v930, %v898
    %v1347 = vpack.c.b16 %v931, %v899
    %v1348 = vpack.c.b16 %v932, %v900
    %v1349 = vpack.c.b16 %v933, %v901
    %v1350 = vpack.c.b16 %v934, %v902
    %v1351 = vpack.c.b16 %v935, %v903
    %v1352 = vpack.c.b16 %v936, %v904
    %v1353 = vpack.c.b16 %v937, %v905
    %v1354 = vpack.c.b16 %v938, %v906
    %v1355 = vpack.c.b16 %v939, %v907
    %v1356 = vpack.c.b16 %v940, %v908
    %v1357 = vpack.c.b16 %v941, %v909
    %v1358 = vpack.c.b16 %v942, %v910
    %v1359 = vpack.c.b16 %v943, %v911
    %v1360 = vpack.c.b16 %v944, %v912
    %v1361 = vpack.c.b16 %v945, %v913
    %v1362 = vpack.c.b16 %v946, %v914
    %v1363 = vpack.c.b16 %v979, %v947
    %v1364 = vpack.c.b16 %v980, %v948
    %v1365 = vpack.c.b16 %v981, %v949
    %v1366 = vpack.c.b16 %v982, %v950
    %v1367 = vpack.c.b16 %v983, %v951
    %v1368 = vpack.c.b16 %v984, %v952
    %v1369 = vpack.c.b16 %v985, %v953
    %v1370 = vpack.c.b16 %v986, %v954
    %v1371 = vpack.c.b16 %v987, %v955
    %v1372 = vpack.c.b16 %v988, %v956
    %v1373 = vpack.c.b16 %v989, %v957
    %v1374 = vpack.c.b16 %v990, %v958
    %v1375 = vpack.c.b16 %v991, %v959
    %v1376 = vpack.c.b16 %v992, %v960
    %v1377 = vpack.c.b16 %v993, %v961
    %v1378 = vpack.c.b16 %v994, %v962
    %v1379 = vpack.c.b16 %v995, %v963
    %v1380 = vpack.c.b16 %v996, %v964
    %v1381 = vpack.c.b16 %v997, %v965
    %v1382 = vpack.c.b16 %v998, %v966
    %v1383 = vpack.c.b16 %v999, %v967
    %v1384 = vpack.c.b16 %v1000, %v968
    %v1385 = vpack.c.b16 %v1001, %v969
    %v1386 = vpack.c.b16 %v1002, %v970
    %v1387 = vpack.c.b16 %v1003, %v971
    %v1388 = vpack.c.b16 %v1004, %v972
    %v1389 = vpack.c.b16 %v1005, %v973
    %v1390 = vpack.c.b16 %v1006, %v974
    %v1391 = vpack.c.b16 %v1007, %v975
    %v1392 = vpack.c.b16 %v1008, %v976
    %v1393 = vpack.c.b16 %v1009, %v977
    %v1394 = vpack.c.b16 %v1010, %v978
    %v1395 = vpack.c.b16 %v1043, %v1011
    %v1396 = vpack.c.b16 %v1044, %v1012
    %v1397 = vpack.c.b16 %v1045, %v1013
    %v1398 = vpack.c.b16 %v1046, %v1014
    %v1399 = vpack.c.b16 %v1047, %v1015
    %v1400 = vpack.c.b16 %v1048, %v1016
    %v1401 = vpack.c.b16 %v1049, %v1017
    %v1402 = vpack.c.b16 %v1050, %v1018
    %v1403 = vpack.c.b16 %v1051, %v1019
    %v1404 = vpack.c.b16 %v1052, %v1020
    %v1405 = vpack.c.b16 %v1053, %v1021
    %v1406 = vpack.c.b16 %v1054, %v1022
    %v1407 = vpack.c.b16 %v1055, %v1023
    %v1408 = vpack.c.b16 %v1056, %v1024
    %v1409 = vpack.c.b16 %v1057, %v1025
    %v1410 = vpack.c.b16 %v1058, %v1026
    %v1411 = vpack.c.b16 %v1059, %v1027
    %v1412 = vpack.c.b16 %v1060, %v1028
    %v1413 = vpack.c.b16 %v1061, %v1029
    %v1414 = vpack.c.b16 %v1062, %v1030
    %v1415 = vpack.c.b16 %v1063, %v1031
    %v1416 = vpack.c.b16 %v1064, %v1032
    %v1417 = vpack.c.b16 %v1065, %v1033
    %v1418 = vpack.c.b16 %v1066, %v1034
    %v1419 = vpack.c.b16 %v1067, %v1035
    %v1420 = vpack.c.b16 %v1068, %v1036
    %v1421 = vpack.c.b16 %v1069, %v1037
    %v1422 = vpack.c.b16 %v1070, %v1038
    %v1423 = vpack.c.b16 %v1071, %v1039
    %v1424 = vpack.c.b16 %v1072, %v1040
    %v1425 = vpack.c.b16 %v1073, %v1041
    %v1426 = vpack.c.b16 %v1074, %v1042
    %v1427 = vpack.c.b16 %v1107, %v1075
    %v1428 = vpack.c.b16 %v1108, %v1076
    %v1429 = vpack.c.b16 %v1109, %v1077
    %v1430 = vpack.c.b16 %v1110, %v1078
    %v1431 = vpack.c.b16 %v1111, %v1079
    %v1432 = vpack.c.b16 %v1112, %v1080
    %v1433 = vpack.c.b16 %v1113, %v1081
    %v1434 = vpack.c.b16 %v1114, %v1082
    %v1435 = vpack.c.b16 %v1115, %v1083
    %v1436 = vpack.c.b16 %v1116, %v1084
    %v1437 = vpack.c.b16 %v1117, %v1085
    %v1438 = vpack.c.b16 %v1118, %v1086
    %v1439 = vpack.c.b16 %v1119, %v1087
    %v1440 = vpack.c.b16 %v1120, %v1088
    %v1441 = vpack.c.b16 %v1121, %v1089
    %v1442 = vpack.c.b16 %v1122, %v1090
    %v1443 = vpack.c.b16 %v1123, %v1091
    %v1444 = vpack.c.b16 %v1124, %v1092
    %v1445 = vpack.c.b16 %v1125, %v1093
    %v1446 = vpack.c.b16 %v1126, %v1094
    %v1447 = vpack.c.b16 %v1127, %v1095
    %v1448 = vpack.c.b16 %v1128, %v1096
    %v1449 = vpack.c.b16 %v1129, %v1097
    %v1450 = vpack.c.b16 %v1130, %v1098
    %v1451 = vpack.c.b16 %v1131, %v1099
    %v1452 = vpack.c.b16 %v1132, %v1100
    %v1453 = vpack.c.b16 %v1133, %v1101
    %v1454 = vpack.c.b16 %v1134, %v1102
    %v1455 = vpack.c.b16 %v1135, %v1103
    %v1456 = vpack.c.b16 %v1136, %v1104
    %v1457 = vpack.c.b16 %v1137, %v1105
    %v1458 = vpack.c.b16 %v1138, %v1106
    %v1459 = vpack.c.b16 %v1171, %v1139
    %v1460 = vpack.c.b16 %v1172, %v1140
    %v1461 = vpack.c.b16 %v1173, %v1141
    %v1462 = vpack.c.b16 %v1174, %v1142
    %v1463 = vpack.c.b16 %v1175, %v1143
    %v1464 = vpack.c.b16 %v1176, %v1144
    %v1465 = vpack.c.b16 %v1177, %v1145
    %v1466 = vpack.c.b16 %v1178, %v1146
    %v1467 = vpack.c.b16 %v1179, %v1147
    %v1468 = vpack.c.b16 %v1180, %v1148
    %v1469 = vpack.c.b16 %v1181, %v1149
    %v1470 = vpack.c.b16 %v1182, %v1150
    %v1471 = vpack.c.b16 %v1183, %v1151
    %v1472 = vpack.c.b16 %v1184, %v1152
    %v1473 = vpack.c.b16 %v1185, %v1153
    %v1474 = vpack.c.b16 %v1186, %v1154
    %v1475 = vpack.c.b16 %v1187, %v1155
    %v1476 = vpack.c.b16 %v1188, %v1156
    %v1477 = vpack.c.b16 %v1189, %v1157
    %v1478 = vpack.c.b16 %v1190, %v1158
    %v1479 = vpack.c.b16 %v1191, %v1159
    %v1480 = vpack.c.b16 %v1192, %v1160
    %v1481 = vpack.c.b16 %v1193, %v1161
    %v1482 = vpack.c.b16 %v1194, %v1162
    %v1483 = vpack.c.b16 %v1195, %v1163
    %v1484 = vpack.c.b16 %v1196, %v1164
    %v1485 = vpack.c.b16 %v1197, %v1165
    %v1486 = vpack.c.b16 %v1198, %v1166
    %v1487 = vpack.c.b16 %v1199, %v1167
    %v1488 = vpack.c.b16 %v1200, %v1168
    %v1489 = vpack.c.b16 %v1201, %v1169
    %v1490 = vpack.c.b16 %v1202, %v1170
    %v1491 = vpack.c.b16 %v1235, %v1203
    %v1492 = vpack.c.b16 %v1236, %v1204
    %v1493 = vpack.c.b16 %v1237, %v1205
    %v1494 = vpack.c.b16 %v1238, %v1206
    %v1495 = vpack.c.b16 %v1239, %v1207
    %v1496 = vpack.c.b16 %v1240, %v1208
    %v1497 = vpack.c.b16 %v1241, %v1209
    %v1498 = vpack.c.b16 %v1242, %v1210
    %v1499 = vpack.c.b16 %v1243, %v1211
    %v1500 = vpack.c.b16 %v1244, %v1212
    %v1501 = vpack.c.b16 %v1245, %v1213
    %v1502 = vpack.c.b16 %v1246, %v1214
    %v1503 = vpack.c.b16 %v1247, %v1215
    %v1504 = vpack.c.b16 %v1248, %v1216
    %v1505 = vpack.c.b16 %v1249, %v1217
    %v1506 = vpack.c.b16 %v1250, %v1218
    %v1507 = vpack.c.b16 %v1251, %v1219
    %v1508 = vpack.c.b16 %v1252, %v1220
    %v1509 = vpack.c.b16 %v1253, %v1221
    %v1510 = vpack.c.b16 %v1254, %v1222
    %v1511 = vpack.c.b16 %v1255, %v1223
    %v1512 = vpack.c.b16 %v1256, %v1224
    %v1513 = vpack.c.b16 %v1257, %v1225
    %v1514 = vpack.c.b16 %v1258, %v1226
    %v1515 = vpack.c.b16 %v1259, %v1227
    %v1516 = vpack.c.b16 %v1260, %v1228
    %v1517 = vpack.c.b16 %v1261, %v1229
    %v1518 = vpack.c.b16 %v1262, %v1230
    %v1519 = vpack.c.b16 %v1263, %v1231
    %v1520 = vpack.c.b16 %v1264, %v1232
    %v1521 = vpack.c.b16 %v1265, %v1233
    %v1522 = vpack.c.b16 %v1266, %v1234
    %1779 = vmatprep.subr.bf16.mxu0 %v1268
    %1780 = vmatpush1.bf16.xpose.msra.mxu0 %v1267
    %1781 = vmatprep.subr.bf16.mxu0 %v1300
    %1782 = vmatpush1.bf16.xpose.msra.mxu0 %v1299
    %1783 = vmatprep.subr.bf16.mxu0 %v1332
    %1784 = vmatpush1.bf16.xpose.msra.mxu0 %v1331
    %1785 = vmatprep.subr.bf16.mxu0 %v1364
    %1786 = vmatpush1.bf16.xpose.msra.mxu0 %v1363
    %1787 = vmatprep.subr.bf16.mxu0 %v1396
    %1788 = vmatpush1.bf16.xpose.msra.mxu0 %v1395
    %1789 = vmatprep.subr.bf16.mxu0 %v1428
    %1790 = vmatpush1.bf16.xpose.msra.mxu0 %v1427
    %1791 = vmatprep.subr.bf16.mxu0 %v1460
    %1792 = vmatpush1.bf16.xpose.msra.mxu0 %v1459
    %1793 = vmatprep.subr.bf16.mxu0 %v1492
    %1794 = vmatpush1.bf16.xpose.msra.mxu0 %v1491
    %1795 = vmatprep.subr.bf16.mxu0 0
    %1796 = vmatpush1.bf16.xpose.msra.mxu0 0
    %1797 = vmatprep.subr.bf16.mxu0 0
    %1798 = vmatpush1.bf16.xpose.msra.mxu0 0
    %1799 = vmatprep.subr.bf16.mxu0 0
    %1800 = vmatpush1.bf16.xpose.msra.mxu0 0
    %1801 = vmatprep.subr.bf16.mxu0 0
    %1802 = vmatpush1.bf16.xpose.msra.mxu0 0
    %1803 = vmatprep.subr.bf16.mxu0 0
    %1804 = vmatpush1.bf16.xpose.msra.mxu0 0
    %1805 = vmatprep.subr.bf16.mxu0 0
    %1806 = vmatpush1.bf16.xpose.msra.mxu0 0
    %1807 = vmatprep.subr.bf16.mxu0 0
    %1808 = vmatpush1.bf16.xpose.msra.mxu0 0
    %1809 = vmatprep.subr.bf16.mxu0 0
    %1810 = vmatpush1.bf16.xpose.msra.mxu0 0
    %1811 = vmatprep.mubr.bf16.mxu0 %v436
    %1812 = vmatmul.mubr.bf16.gmra.mrb[0].mxu0 %v435
    %v1813 = vpop.f32.mrb[0].mxu0
    %v1814 = vadd.f32 %v337, %v1813
    %v1815 = vpop.f32.mrb[0].mxu0
    %v1816 = vpop.f32.mrb[0].mxu0
    %v1817 = vadd.f32 %v337, %v1816
    %v1818 = vpop.f32.mrb[0].mxu0
    %1819 = vdwg.mxu0
    %1820 = vmatprep.subr.bf16.mxu0 %v1270
    %1821 = vmatpush1.bf16.xpose.msra.mxu0 %v1269
    %1822 = vmatprep.subr.bf16.mxu0 %v1302
    %1823 = vmatpush1.bf16.xpose.msra.mxu0 %v1301
    %1824 = vmatprep.subr.bf16.mxu0 %v1334
    %1825 = vmatpush1.bf16.xpose.msra.mxu0 %v1333
    %1826 = vmatprep.subr.bf16.mxu0 %v1366
    %1827 = vmatpush1.bf16.xpose.msra.mxu0 %v1365
    %1828 = vmatprep.subr.bf16.mxu0 %v1398
    %1829 = vmatpush1.bf16.xpose.msra.mxu0 %v1397
    %1830 = vmatprep.subr.bf16.mxu0 %v1430
    %1831 = vmatpush1.bf16.xpose.msra.mxu0 %v1429
    %1832 = vmatprep.subr.bf16.mxu0 %v1462
    %1833 = vmatpush1.bf16.xpose.msra.mxu0 %v1461
    %1834 = vmatprep.subr.bf16.mxu0 %v1494
    %1835 = vmatpush1.bf16.xpose.msra.mxu0 %v1493
    %1836 = vmatprep.subr.bf16.mxu0 0
    %1837 = vmatpush1.bf16.xpose.msra.mxu0 0
    %1838 = vmatprep.subr.bf16.mxu0 0
    %1839 = vmatpush1.bf16.xpose.msra.mxu0 0
    %1840 = vmatprep.subr.bf16.mxu0 0
    %1841 = vmatpush1.bf16.xpose.msra.mxu0 0
    %1842 = vmatprep.subr.bf16.mxu0 0
    %1843 = vmatpush1.bf16.xpose.msra.mxu0 0
    %1844 = vmatprep.subr.bf16.mxu0 0
    %1845 = vmatpush1.bf16.xpose.msra.mxu0 0
    %1846 = vmatprep.subr.bf16.mxu0 0
    %1847 = vmatpush1.bf16.xpose.msra.mxu0 0
    %1848 = vmatprep.subr.bf16.mxu0 0
    %1849 = vmatpush1.bf16.xpose.msra.mxu0 0
    %1850 = vmatprep.subr.bf16.mxu0 0
    %1851 = vmatpush1.bf16.xpose.msra.mxu0 0
    %1852 = vmatprep.mubr.bf16.mxu0 %v438
    %1853 = vmatmul.mubr.bf16.gmra.mrb[0].mxu0 %v437
    %v1854 = vpop.f32.mrb[0].mxu0
    %v1855 = vadd.f32 %v1814, %v1854
    %v1856 = vpop.f32.mrb[0].mxu0
    %v1857 = vpop.f32.mrb[0].mxu0
    %v1858 = vadd.f32 %v1817, %v1857
    %v1859 = vpop.f32.mrb[0].mxu0
    %1860 = vdwg.mxu0
    %1861 = vmatprep.subr.bf16.mxu0 %v1272
    %1862 = vmatpush1.bf16.xpose.msra.mxu0 %v1271
    %1863 = vmatprep.subr.bf16.mxu0 %v1304
    %1864 = vmatpush1.bf16.xpose.msra.mxu0 %v1303
    %1865 = vmatprep.subr.bf16.mxu0 %v1336
    %1866 = vmatpush1.bf16.xpose.msra.mxu0 %v1335
    %1867 = vmatprep.subr.bf16.mxu0 %v1368
    %1868 = vmatpush1.bf16.xpose.msra.mxu0 %v1367
    %1869 = vmatprep.subr.bf16.mxu0 %v1400
    %1870 = vmatpush1.bf16.xpose.msra.mxu0 %v1399
    %1871 = vmatprep.subr.bf16.mxu0 %v1432
    %1872 = vmatpush1.bf16.xpose.msra.mxu0 %v1431
    %1873 = vmatprep.subr.bf16.mxu0 %v1464
    %1874 = vmatpush1.bf16.xpose.msra.mxu0 %v1463
    %1875 = vmatprep.subr.bf16.mxu0 %v1496
    %1876 = vmatpush1.bf16.xpose.msra.mxu0 %v1495
    %1877 = vmatprep.subr.bf16.mxu0 0
    %1878 = vmatpush1.bf16.xpose.msra.mxu0 0
    %1879 = vmatprep.subr.bf16.mxu0 0
    %1880 = vmatpush1.bf16.xpose.msra.mxu0 0
    %1881 = vmatprep.subr.bf16.mxu0 0
    %1882 = vmatpush1.bf16.xpose.msra.mxu0 0
    %1883 = vmatprep.subr.bf16.mxu0 0
    %1884 = vmatpush1.bf16.xpose.msra.mxu0 0
    %1885 = vmatprep.subr.bf16.mxu0 0
    %1886 = vmatpush1.bf16.xpose.msra.mxu0 0
    %1887 = vmatprep.subr.bf16.mxu0 0
    %1888 = vmatpush1.bf16.xpose.msra.mxu0 0
    %1889 = vmatprep.subr.bf16.mxu0 0
    %1890 = vmatpush1.bf16.xpose.msra.mxu0 0
    %1891 = vmatprep.subr.bf16.mxu0 0
    %1892 = vmatpush1.bf16.xpose.msra.mxu0 0
    %1893 = vmatprep.mubr.bf16.mxu0 %v440
    %1894 = vmatmul.mubr.bf16.gmra.mrb[0].mxu0 %v439
    %v1895 = vpop.f32.mrb[0].mxu0
    %v1896 = vadd.f32 %v1855, %v1895
    %v1897 = vpop.f32.mrb[0].mxu0
    %v1898 = vpop.f32.mrb[0].mxu0
    %v1899 = vadd.f32 %v1858, %v1898
    %v1900 = vpop.f32.mrb[0].mxu0
    %1901 = vdwg.mxu0
    %1902 = vmatprep.subr.bf16.mxu0 %v1274
    %1903 = vmatpush1.bf16.xpose.msra.mxu0 %v1273
    %1904 = vmatprep.subr.bf16.mxu0 %v1306
    %1905 = vmatpush1.bf16.xpose.msra.mxu0 %v1305
    %1906 = vmatprep.subr.bf16.mxu0 %v1338
    %1907 = vmatpush1.bf16.xpose.msra.mxu0 %v1337
    %1908 = vmatprep.subr.bf16.mxu0 %v1370
    %1909 = vmatpush1.bf16.xpose.msra.mxu0 %v1369
    %1910 = vmatprep.subr.bf16.mxu0 %v1402
    %1911 = vmatpush1.bf16.xpose.msra.mxu0 %v1401
    %1912 = vmatprep.subr.bf16.mxu0 %v1434
    %1913 = vmatpush1.bf16.xpose.msra.mxu0 %v1433
    %1914 = vmatprep.subr.bf16.mxu0 %v1466
    %1915 = vmatpush1.bf16.xpose.msra.mxu0 %v1465
    %1916 = vmatprep.subr.bf16.mxu0 %v1498
    %1917 = vmatpush1.bf16.xpose.msra.mxu0 %v1497
    %1918 = vmatprep.subr.bf16.mxu0 0
    %1919 = vmatpush1.bf16.xpose.msra.mxu0 0
    %1920 = vmatprep.subr.bf16.mxu0 0
    %1921 = vmatpush1.bf16.xpose.msra.mxu0 0
    %1922 = vmatprep.subr.bf16.mxu0 0
    %1923 = vmatpush1.bf16.xpose.msra.mxu0 0
    %1924 = vmatprep.subr.bf16.mxu0 0
    %1925 = vmatpush1.bf16.xpose.msra.mxu0 0
    %1926 = vmatprep.subr.bf16.mxu0 0
    %1927 = vmatpush1.bf16.xpose.msra.mxu0 0
    %1928 = vmatprep.subr.bf16.mxu0 0
    %1929 = vmatpush1.bf16.xpose.msra.mxu0 0
    %1930 = vmatprep.subr.bf16.mxu0 0
    %1931 = vmatpush1.bf16.xpose.msra.mxu0 0
    %1932 = vmatprep.subr.bf16.mxu0 0
    %1933 = vmatpush1.bf16.xpose.msra.mxu0 0
    %1934 = vmatprep.mubr.bf16.mxu0 %v442
    %1935 = vmatmul.mubr.bf16.gmra.mrb[0].mxu0 %v441
    %v1936 = vpop.f32.mrb[0].mxu0
    %v1937 = vadd.f32 %v1896, %v1936
    %v1938 = vpop.f32.mrb[0].mxu0
    %v1939 = vpop.f32.mrb[0].mxu0
    %v1940 = vadd.f32 %v1899, %v1939
    %v1941 = vpop.f32.mrb[0].mxu0
    %1942 = vdwg.mxu0
    %1943 = vmatprep.subr.bf16.mxu0 %v1276
    %1944 = vmatpush1.bf16.xpose.msra.mxu0 %v1275
    %1945 = vmatprep.subr.bf16.mxu0 %v1308
    %1946 = vmatpush1.bf16.xpose.msra.mxu0 %v1307
    %1947 = vmatprep.subr.bf16.mxu0 %v1340
    %1948 = vmatpush1.bf16.xpose.msra.mxu0 %v1339
    %1949 = vmatprep.subr.bf16.mxu0 %v1372
    %1950 = vmatpush1.bf16.xpose.msra.mxu0 %v1371
    %1951 = vmatprep.subr.bf16.mxu0 %v1404
    %1952 = vmatpush1.bf16.xpose.msra.mxu0 %v1403
    %1953 = vmatprep.subr.bf16.mxu0 %v1436
    %1954 = vmatpush1.bf16.xpose.msra.mxu0 %v1435
    %1955 = vmatprep.subr.bf16.mxu0 %v1468
    %1956 = vmatpush1.bf16.xpose.msra.mxu0 %v1467
    %1957 = vmatprep.subr.bf16.mxu0 %v1500
    %1958 = vmatpush1.bf16.xpose.msra.mxu0 %v1499
    %1959 = vmatprep.subr.bf16.mxu0 0
    %1960 = vmatpush1.bf16.xpose.msra.mxu0 0
    %1961 = vmatprep.subr.bf16.mxu0 0
    %1962 = vmatpush1.bf16.xpose.msra.mxu0 0
    %1963 = vmatprep.subr.bf16.mxu0 0
    %1964 = vmatpush1.bf16.xpose.msra.mxu0 0
    %1965 = vmatprep.subr.bf16.mxu0 0
    %1966 = vmatpush1.bf16.xpose.msra.mxu0 0
    %1967 = vmatprep.subr.bf16.mxu0 0
    %1968 = vmatpush1.bf16.xpose.msra.mxu0 0
    %1969 = vmatprep.subr.bf16.mxu0 0
    %1970 = vmatpush1.bf16.xpose.msra.mxu0 0
    %1971 = vmatprep.subr.bf16.mxu0 0
    %1972 = vmatpush1.bf16.xpose.msra.mxu0 0
    %1973 = vmatprep.subr.bf16.mxu0 0
    %1974 = vmatpush1.bf16.xpose.msra.mxu0 0
    %1975 = vmatprep.mubr.bf16.mxu0 %v444
    %1976 = vmatmul.mubr.bf16.gmra.mrb[0].mxu0 %v443
    %v1977 = vpop.f32.mrb[0].mxu0
    %v1978 = vadd.f32 %v1937, %v1977
    %v1979 = vpop.f32.mrb[0].mxu0
    %v1980 = vpop.f32.mrb[0].mxu0
    %v1981 = vadd.f32 %v1940, %v1980
    %v1982 = vpop.f32.mrb[0].mxu0
    %1983 = vdwg.mxu0
    %1984 = vmatprep.subr.bf16.mxu0 %v1278
    %1985 = vmatpush1.bf16.xpose.msra.mxu0 %v1277
    %1986 = vmatprep.subr.bf16.mxu0 %v1310
    %1987 = vmatpush1.bf16.xpose.msra.mxu0 %v1309
    %1988 = vmatprep.subr.bf16.mxu0 %v1342
    %1989 = vmatpush1.bf16.xpose.msra.mxu0 %v1341
    %1990 = vmatprep.subr.bf16.mxu0 %v1374
    %1991 = vmatpush1.bf16.xpose.msra.mxu0 %v1373
    %1992 = vmatprep.subr.bf16.mxu0 %v1406
    %1993 = vmatpush1.bf16.xpose.msra.mxu0 %v1405
    %1994 = vmatprep.subr.bf16.mxu0 %v1438
    %1995 = vmatpush1.bf16.xpose.msra.mxu0 %v1437
    %1996 = vmatprep.subr.bf16.mxu0 %v1470
    %1997 = vmatpush1.bf16.xpose.msra.mxu0 %v1469
    %1998 = vmatprep.subr.bf16.mxu0 %v1502
    %1999 = vmatpush1.bf16.xpose.msra.mxu0 %v1501
    %2000 = vmatprep.subr.bf16.mxu0 0
    %2001 = vmatpush1.bf16.xpose.msra.mxu0 0
    %2002 = vmatprep.subr.bf16.mxu0 0
    %2003 = vmatpush1.bf16.xpose.msra.mxu0 0
    %2004 = vmatprep.subr.bf16.mxu0 0
    %2005 = vmatpush1.bf16.xpose.msra.mxu0 0
    %2006 = vmatprep.subr.bf16.mxu0 0
    %2007 = vmatpush1.bf16.xpose.msra.mxu0 0
    %2008 = vmatprep.subr.bf16.mxu0 0
    %2009 = vmatpush1.bf16.xpose.msra.mxu0 0
    %2010 = vmatprep.subr.bf16.mxu0 0
    %2011 = vmatpush1.bf16.xpose.msra.mxu0 0
    %2012 = vmatprep.subr.bf16.mxu0 0
    %2013 = vmatpush1.bf16.xpose.msra.mxu0 0
    %2014 = vmatprep.subr.bf16.mxu0 0
    %2015 = vmatpush1.bf16.xpose.msra.mxu0 0
    %2016 = vmatprep.mubr.bf16.mxu0 %v446
    %2017 = vmatmul.mubr.bf16.gmra.mrb[0].mxu0 %v445
    %v2018 = vpop.f32.mrb[0].mxu0
    %v2019 = vadd.f32 %v1978, %v2018
    %v2020 = vpop.f32.mrb[0].mxu0
    %v2021 = vpop.f32.mrb[0].mxu0
    %v2022 = vadd.f32 %v1981, %v2021
    %v2023 = vpop.f32.mrb[0].mxu0
    %2024 = vdwg.mxu0
    %2025 = vmatprep.subr.bf16.mxu0 %v1280
    %2026 = vmatpush1.bf16.xpose.msra.mxu0 %v1279
    %2027 = vmatprep.subr.bf16.mxu0 %v1312
    %2028 = vmatpush1.bf16.xpose.msra.mxu0 %v1311
    %2029 = vmatprep.subr.bf16.mxu0 %v1344
    %2030 = vmatpush1.bf16.xpose.msra.mxu0 %v1343
    %2031 = vmatprep.subr.bf16.mxu0 %v1376
    %2032 = vmatpush1.bf16.xpose.msra.mxu0 %v1375
    %2033 = vmatprep.subr.bf16.mxu0 %v1408
    %2034 = vmatpush1.bf16.xpose.msra.mxu0 %v1407
    %2035 = vmatprep.subr.bf16.mxu0 %v1440
    %2036 = vmatpush1.bf16.xpose.msra.mxu0 %v1439
    %2037 = vmatprep.subr.bf16.mxu0 %v1472
    %2038 = vmatpush1.bf16.xpose.msra.mxu0 %v1471
    %2039 = vmatprep.subr.bf16.mxu0 %v1504
    %2040 = vmatpush1.bf16.xpose.msra.mxu0 %v1503
    %2041 = vmatprep.subr.bf16.mxu0 0
    %2042 = vmatpush1.bf16.xpose.msra.mxu0 0
    %2043 = vmatprep.subr.bf16.mxu0 0
    %2044 = vmatpush1.bf16.xpose.msra.mxu0 0
    %2045 = vmatprep.subr.bf16.mxu0 0
    %2046 = vmatpush1.bf16.xpose.msra.mxu0 0
    %2047 = vmatprep.subr.bf16.mxu0 0
    %2048 = vmatpush1.bf16.xpose.msra.mxu0 0
    %2049 = vmatprep.subr.bf16.mxu0 0
    %2050 = vmatpush1.bf16.xpose.msra.mxu0 0
    %2051 = vmatprep.subr.bf16.mxu0 0
    %2052 = vmatpush1.bf16.xpose.msra.mxu0 0
    %2053 = vmatprep.subr.bf16.mxu0 0
    %2054 = vmatpush1.bf16.xpose.msra.mxu0 0
    %2055 = vmatprep.subr.bf16.mxu0 0
    %2056 = vmatpush1.bf16.xpose.msra.mxu0 0
    %2057 = vmatprep.mubr.bf16.mxu0 %v448
    %2058 = vmatmul.mubr.bf16.gmra.mrb[0].mxu0 %v447
    %v2059 = vpop.f32.mrb[0].mxu0
    %v2060 = vadd.f32 %v2019, %v2059
    %v2061 = vpop.f32.mrb[0].mxu0
    %v2062 = vpop.f32.mrb[0].mxu0
    %v2063 = vadd.f32 %v2022, %v2062
    %v2064 = vpop.f32.mrb[0].mxu0
    %2065 = vdwg.mxu0
    %2066 = vmatprep.subr.bf16.mxu0 %v1282
    %2067 = vmatpush1.bf16.xpose.msra.mxu0 %v1281
    %2068 = vmatprep.subr.bf16.mxu0 %v1314
    %2069 = vmatpush1.bf16.xpose.msra.mxu0 %v1313
    %2070 = vmatprep.subr.bf16.mxu0 %v1346
    %2071 = vmatpush1.bf16.xpose.msra.mxu0 %v1345
    %2072 = vmatprep.subr.bf16.mxu0 %v1378
    %2073 = vmatpush1.bf16.xpose.msra.mxu0 %v1377
    %2074 = vmatprep.subr.bf16.mxu0 %v1410
    %2075 = vmatpush1.bf16.xpose.msra.mxu0 %v1409
    %2076 = vmatprep.subr.bf16.mxu0 %v1442
    %2077 = vmatpush1.bf16.xpose.msra.mxu0 %v1441
    %2078 = vmatprep.subr.bf16.mxu0 %v1474
    %2079 = vmatpush1.bf16.xpose.msra.mxu0 %v1473
    %2080 = vmatprep.subr.bf16.mxu0 %v1506
    %2081 = vmatpush1.bf16.xpose.msra.mxu0 %v1505
    %2082 = vmatprep.subr.bf16.mxu0 0
    %2083 = vmatpush1.bf16.xpose.msra.mxu0 0
    %2084 = vmatprep.subr.bf16.mxu0 0
    %2085 = vmatpush1.bf16.xpose.msra.mxu0 0
    %2086 = vmatprep.subr.bf16.mxu0 0
    %2087 = vmatpush1.bf16.xpose.msra.mxu0 0
    %2088 = vmatprep.subr.bf16.mxu0 0
    %2089 = vmatpush1.bf16.xpose.msra.mxu0 0
    %2090 = vmatprep.subr.bf16.mxu0 0
    %2091 = vmatpush1.bf16.xpose.msra.mxu0 0
    %2092 = vmatprep.subr.bf16.mxu0 0
    %2093 = vmatpush1.bf16.xpose.msra.mxu0 0
    %2094 = vmatprep.subr.bf16.mxu0 0
    %2095 = vmatpush1.bf16.xpose.msra.mxu0 0
    %2096 = vmatprep.subr.bf16.mxu0 0
    %2097 = vmatpush1.bf16.xpose.msra.mxu0 0
    %2098 = vmatprep.mubr.bf16.mxu0 %v450
    %2099 = vmatmul.mubr.bf16.gmra.mrb[0].mxu0 %v449
    %v2100 = vpop.f32.mrb[0].mxu0
    %v2101 = vadd.f32 %v2060, %v2100
    %v2102 = vpop.f32.mrb[0].mxu0
    %v2103 = vpop.f32.mrb[0].mxu0
    %v2104 = vadd.f32 %v2063, %v2103
    %v2105 = vpop.f32.mrb[0].mxu0
    %2106 = vdwg.mxu0
    %2107 = vmatprep.subr.bf16.mxu0 %v1284
    %2108 = vmatpush1.bf16.xpose.msra.mxu0 %v1283
    %2109 = vmatprep.subr.bf16.mxu0 %v1316
    %2110 = vmatpush1.bf16.xpose.msra.mxu0 %v1315
    %2111 = vmatprep.subr.bf16.mxu0 %v1348
    %2112 = vmatpush1.bf16.xpose.msra.mxu0 %v1347
    %2113 = vmatprep.subr.bf16.mxu0 %v1380
    %2114 = vmatpush1.bf16.xpose.msra.mxu0 %v1379
    %2115 = vmatprep.subr.bf16.mxu0 %v1412
    %2116 = vmatpush1.bf16.xpose.msra.mxu0 %v1411
    %2117 = vmatprep.subr.bf16.mxu0 %v1444
    %2118 = vmatpush1.bf16.xpose.msra.mxu0 %v1443
    %2119 = vmatprep.subr.bf16.mxu0 %v1476
    %2120 = vmatpush1.bf16.xpose.msra.mxu0 %v1475
    %2121 = vmatprep.subr.bf16.mxu0 %v1508
    %2122 = vmatpush1.bf16.xpose.msra.mxu0 %v1507
    %2123 = vmatprep.subr.bf16.mxu0 0
    %2124 = vmatpush1.bf16.xpose.msra.mxu0 0
    %2125 = vmatprep.subr.bf16.mxu0 0
    %2126 = vmatpush1.bf16.xpose.msra.mxu0 0
    %2127 = vmatprep.subr.bf16.mxu0 0
    %2128 = vmatpush1.bf16.xpose.msra.mxu0 0
    %2129 = vmatprep.subr.bf16.mxu0 0
    %2130 = vmatpush1.bf16.xpose.msra.mxu0 0
    %2131 = vmatprep.subr.bf16.mxu0 0
    %2132 = vmatpush1.bf16.xpose.msra.mxu0 0
    %2133 = vmatprep.subr.bf16.mxu0 0
    %2134 = vmatpush1.bf16.xpose.msra.mxu0 0
    %2135 = vmatprep.subr.bf16.mxu0 0
    %2136 = vmatpush1.bf16.xpose.msra.mxu0 0
    %2137 = vmatprep.subr.bf16.mxu0 0
    %2138 = vmatpush1.bf16.xpose.msra.mxu0 0
    %2139 = vmatprep.mubr.bf16.mxu0 %v452
    %2140 = vmatmul.mubr.bf16.gmra.mrb[0].mxu0 %v451
    %v2141 = vpop.f32.mrb[0].mxu0
    %v2142 = vadd.f32 %v2101, %v2141
    %v2143 = vpop.f32.mrb[0].mxu0
    %v2144 = vpop.f32.mrb[0].mxu0
    %v2145 = vadd.f32 %v2104, %v2144
    %v2146 = vpop.f32.mrb[0].mxu0
    %2147 = vdwg.mxu0
    %2148 = vmatprep.subr.bf16.mxu0 %v1286
    %2149 = vmatpush1.bf16.xpose.msra.mxu0 %v1285
    %2150 = vmatprep.subr.bf16.mxu0 %v1318
    %2151 = vmatpush1.bf16.xpose.msra.mxu0 %v1317
    %2152 = vmatprep.subr.bf16.mxu0 %v1350
    %2153 = vmatpush1.bf16.xpose.msra.mxu0 %v1349
    %2154 = vmatprep.subr.bf16.mxu0 %v1382
    %2155 = vmatpush1.bf16.xpose.msra.mxu0 %v1381
    %2156 = vmatprep.subr.bf16.mxu0 %v1414
    %2157 = vmatpush1.bf16.xpose.msra.mxu0 %v1413
    %2158 = vmatprep.subr.bf16.mxu0 %v1446
    %2159 = vmatpush1.bf16.xpose.msra.mxu0 %v1445
    %2160 = vmatprep.subr.bf16.mxu0 %v1478
    %2161 = vmatpush1.bf16.xpose.msra.mxu0 %v1477
    %2162 = vmatprep.subr.bf16.mxu0 %v1510
    %2163 = vmatpush1.bf16.xpose.msra.mxu0 %v1509
    %2164 = vmatprep.subr.bf16.mxu0 0
    %2165 = vmatpush1.bf16.xpose.msra.mxu0 0
    %2166 = vmatprep.subr.bf16.mxu0 0
    %2167 = vmatpush1.bf16.xpose.msra.mxu0 0
    %2168 = vmatprep.subr.bf16.mxu0 0
    %2169 = vmatpush1.bf16.xpose.msra.mxu0 0
    %2170 = vmatprep.subr.bf16.mxu0 0
    %2171 = vmatpush1.bf16.xpose.msra.mxu0 0
    %2172 = vmatprep.subr.bf16.mxu0 0
    %2173 = vmatpush1.bf16.xpose.msra.mxu0 0
    %2174 = vmatprep.subr.bf16.mxu0 0
    %2175 = vmatpush1.bf16.xpose.msra.mxu0 0
    %2176 = vmatprep.subr.bf16.mxu0 0
    %2177 = vmatpush1.bf16.xpose.msra.mxu0 0
    %2178 = vmatprep.subr.bf16.mxu0 0
    %2179 = vmatpush1.bf16.xpose.msra.mxu0 0
    %2180 = vmatprep.mubr.bf16.mxu0 %v454
    %2181 = vmatmul.mubr.bf16.gmra.mrb[0].mxu0 %v453
    %v2182 = vpop.f32.mrb[0].mxu0
    %v2183 = vadd.f32 %v2142, %v2182
    %v2184 = vpop.f32.mrb[0].mxu0
    %v2185 = vpop.f32.mrb[0].mxu0
    %v2186 = vadd.f32 %v2145, %v2185
    %v2187 = vpop.f32.mrb[0].mxu0
    %2188 = vdwg.mxu0
    %2189 = vmatprep.subr.bf16.mxu0 %v1288
    %2190 = vmatpush1.bf16.xpose.msra.mxu0 %v1287
    %2191 = vmatprep.subr.bf16.mxu0 %v1320
    %2192 = vmatpush1.bf16.xpose.msra.mxu0 %v1319
    %2193 = vmatprep.subr.bf16.mxu0 %v1352
    %2194 = vmatpush1.bf16.xpose.msra.mxu0 %v1351
    %2195 = vmatprep.subr.bf16.mxu0 %v1384
    %2196 = vmatpush1.bf16.xpose.msra.mxu0 %v1383
    %2197 = vmatprep.subr.bf16.mxu0 %v1416
    %2198 = vmatpush1.bf16.xpose.msra.mxu0 %v1415
    %2199 = vmatprep.subr.bf16.mxu0 %v1448
    %2200 = vmatpush1.bf16.xpose.msra.mxu0 %v1447
    %2201 = vmatprep.subr.bf16.mxu0 %v1480
    %2202 = vmatpush1.bf16.xpose.msra.mxu0 %v1479
    %2203 = vmatprep.subr.bf16.mxu0 %v1512
    %2204 = vmatpush1.bf16.xpose.msra.mxu0 %v1511
    %2205 = vmatprep.subr.bf16.mxu0 0
    %2206 = vmatpush1.bf16.xpose.msra.mxu0 0
    %2207 = vmatprep.subr.bf16.mxu0 0
    %2208 = vmatpush1.bf16.xpose.msra.mxu0 0
    %2209 = vmatprep.subr.bf16.mxu0 0
    %2210 = vmatpush1.bf16.xpose.msra.mxu0 0
    %2211 = vmatprep.subr.bf16.mxu0 0
    %2212 = vmatpush1.bf16.xpose.msra.mxu0 0
    %2213 = vmatprep.subr.bf16.mxu0 0
    %2214 = vmatpush1.bf16.xpose.msra.mxu0 0
    %2215 = vmatprep.subr.bf16.mxu0 0
    %2216 = vmatpush1.bf16.xpose.msra.mxu0 0
    %2217 = vmatprep.subr.bf16.mxu0 0
    %2218 = vmatpush1.bf16.xpose.msra.mxu0 0
    %2219 = vmatprep.subr.bf16.mxu0 0
    %2220 = vmatpush1.bf16.xpose.msra.mxu0 0
    %2221 = vmatprep.mubr.bf16.mxu0 %v456
    %2222 = vmatmul.mubr.bf16.gmra.mrb[0].mxu0 %v455
    %v2223 = vpop.f32.mrb[0].mxu0
    %v2224 = vadd.f32 %v2183, %v2223
    %v2225 = vpop.f32.mrb[0].mxu0
    %v2226 = vpop.f32.mrb[0].mxu0
    %v2227 = vadd.f32 %v2186, %v2226
    %v2228 = vpop.f32.mrb[0].mxu0
    %2229 = vdwg.mxu0
    %2230 = vmatprep.subr.bf16.mxu0 %v1290
    %2231 = vmatpush1.bf16.xpose.msra.mxu0 %v1289
    %2232 = vmatprep.subr.bf16.mxu0 %v1322
    %2233 = vmatpush1.bf16.xpose.msra.mxu0 %v1321
    %2234 = vmatprep.subr.bf16.mxu0 %v1354
    %2235 = vmatpush1.bf16.xpose.msra.mxu0 %v1353
    %2236 = vmatprep.subr.bf16.mxu0 %v1386
    %2237 = vmatpush1.bf16.xpose.msra.mxu0 %v1385
    %2238 = vmatprep.subr.bf16.mxu0 %v1418
    %2239 = vmatpush1.bf16.xpose.msra.mxu0 %v1417
    %2240 = vmatprep.subr.bf16.mxu0 %v1450
    %2241 = vmatpush1.bf16.xpose.msra.mxu0 %v1449
    %2242 = vmatprep.subr.bf16.mxu0 %v1482
    %2243 = vmatpush1.bf16.xpose.msra.mxu0 %v1481
    %2244 = vmatprep.subr.bf16.mxu0 %v1514
    %2245 = vmatpush1.bf16.xpose.msra.mxu0 %v1513
    %2246 = vmatprep.subr.bf16.mxu0 0
    %2247 = vmatpush1.bf16.xpose.msra.mxu0 0
    %2248 = vmatprep.subr.bf16.mxu0 0
    %2249 = vmatpush1.bf16.xpose.msra.mxu0 0
    %2250 = vmatprep.subr.bf16.mxu0 0
    %2251 = vmatpush1.bf16.xpose.msra.mxu0 0
    %2252 = vmatprep.subr.bf16.mxu0 0
    %2253 = vmatpush1.bf16.xpose.msra.mxu0 0
    %2254 = vmatprep.subr.bf16.mxu0 0
    %2255 = vmatpush1.bf16.xpose.msra.mxu0 0
    %2256 = vmatprep.subr.bf16.mxu0 0
    %2257 = vmatpush1.bf16.xpose.msra.mxu0 0
    %2258 = vmatprep.subr.bf16.mxu0 0
    %2259 = vmatpush1.bf16.xpose.msra.mxu0 0
    %2260 = vmatprep.subr.bf16.mxu0 0
    %2261 = vmatpush1.bf16.xpose.msra.mxu0 0
    %2262 = vmatprep.mubr.bf16.mxu0 %v458
    %2263 = vmatmul.mubr.bf16.gmra.mrb[0].mxu0 %v457
    %v2264 = vpop.f32.mrb[0].mxu0
    %v2265 = vadd.f32 %v2224, %v2264
    %v2266 = vpop.f32.mrb[0].mxu0
    %v2267 = vpop.f32.mrb[0].mxu0
    %v2268 = vadd.f32 %v2227, %v2267
    %v2269 = vpop.f32.mrb[0].mxu0
    %2270 = vdwg.mxu0
    %2271 = vmatprep.subr.bf16.mxu0 %v1292
    %2272 = vmatpush1.bf16.xpose.msra.mxu0 %v1291
    %2273 = vmatprep.subr.bf16.mxu0 %v1324
    %2274 = vmatpush1.bf16.xpose.msra.mxu0 %v1323
    %2275 = vmatprep.subr.bf16.mxu0 %v1356
    %2276 = vmatpush1.bf16.xpose.msra.mxu0 %v1355
    %2277 = vmatprep.subr.bf16.mxu0 %v1388
    %2278 = vmatpush1.bf16.xpose.msra.mxu0 %v1387
    %2279 = vmatprep.subr.bf16.mxu0 %v1420
    %2280 = vmatpush1.bf16.xpose.msra.mxu0 %v1419
    %2281 = vmatprep.subr.bf16.mxu0 %v1452
    %2282 = vmatpush1.bf16.xpose.msra.mxu0 %v1451
    %2283 = vmatprep.subr.bf16.mxu0 %v1484
    %2284 = vmatpush1.bf16.xpose.msra.mxu0 %v1483
    %2285 = vmatprep.subr.bf16.mxu0 %v1516
    %2286 = vmatpush1.bf16.xpose.msra.mxu0 %v1515
    %2287 = vmatprep.subr.bf16.mxu0 0
    %2288 = vmatpush1.bf16.xpose.msra.mxu0 0
    %2289 = vmatprep.subr.bf16.mxu0 0
    %2290 = vmatpush1.bf16.xpose.msra.mxu0 0
    %2291 = vmatprep.subr.bf16.mxu0 0
    %2292 = vmatpush1.bf16.xpose.msra.mxu0 0
    %2293 = vmatprep.subr.bf16.mxu0 0
    %2294 = vmatpush1.bf16.xpose.msra.mxu0 0
    %2295 = vmatprep.subr.bf16.mxu0 0
    %2296 = vmatpush1.bf16.xpose.msra.mxu0 0
    %2297 = vmatprep.subr.bf16.mxu0 0
    %2298 = vmatpush1.bf16.xpose.msra.mxu0 0
    %2299 = vmatprep.subr.bf16.mxu0 0
    %2300 = vmatpush1.bf16.xpose.msra.mxu0 0
    %2301 = vmatprep.subr.bf16.mxu0 0
    %2302 = vmatpush1.bf16.xpose.msra.mxu0 0
    %2303 = vmatprep.mubr.bf16.mxu0 %v460
    %2304 = vmatmul.mubr.bf16.gmra.mrb[0].mxu0 %v459
    %v2305 = vpop.f32.mrb[0].mxu0
    %v2306 = vadd.f32 %v2265, %v2305
    %v2307 = vpop.f32.mrb[0].mxu0
    %v2308 = vpop.f32.mrb[0].mxu0
    %v2309 = vadd.f32 %v2268, %v2308
    %v2310 = vpop.f32.mrb[0].mxu0
    %2311 = vdwg.mxu0
    %2312 = vmatprep.subr.bf16.mxu0 %v1294
    %2313 = vmatpush1.bf16.xpose.msra.mxu0 %v1293
    %2314 = vmatprep.subr.bf16.mxu0 %v1326
    %2315 = vmatpush1.bf16.xpose.msra.mxu0 %v1325
    %2316 = vmatprep.subr.bf16.mxu0 %v1358
    %2317 = vmatpush1.bf16.xpose.msra.mxu0 %v1357
    %2318 = vmatprep.subr.bf16.mxu0 %v1390
    %2319 = vmatpush1.bf16.xpose.msra.mxu0 %v1389
    %2320 = vmatprep.subr.bf16.mxu0 %v1422
    %2321 = vmatpush1.bf16.xpose.msra.mxu0 %v1421
    %2322 = vmatprep.subr.bf16.mxu0 %v1454
    %2323 = vmatpush1.bf16.xpose.msra.mxu0 %v1453
    %2324 = vmatprep.subr.bf16.mxu0 %v1486
    %2325 = vmatpush1.bf16.xpose.msra.mxu0 %v1485
    %2326 = vmatprep.subr.bf16.mxu0 %v1518
    %2327 = vmatpush1.bf16.xpose.msra.mxu0 %v1517
    %2328 = vmatprep.subr.bf16.mxu0 0
    %2329 = vmatpush1.bf16.xpose.msra.mxu0 0
    %2330 = vmatprep.subr.bf16.mxu0 0
    %2331 = vmatpush1.bf16.xpose.msra.mxu0 0
    %2332 = vmatprep.subr.bf16.mxu0 0
    %2333 = vmatpush1.bf16.xpose.msra.mxu0 0
    %2334 = vmatprep.subr.bf16.mxu0 0
    %2335 = vmatpush1.bf16.xpose.msra.mxu0 0
    %2336 = vmatprep.subr.bf16.mxu0 0
    %2337 = vmatpush1.bf16.xpose.msra.mxu0 0
    %2338 = vmatprep.subr.bf16.mxu0 0
    %2339 = vmatpush1.bf16.xpose.msra.mxu0 0
    %2340 = vmatprep.subr.bf16.mxu0 0
    %2341 = vmatpush1.bf16.xpose.msra.mxu0 0
    %2342 = vmatprep.subr.bf16.mxu0 0
    %2343 = vmatpush1.bf16.xpose.msra.mxu0 0
    %2344 = vmatprep.mubr.bf16.mxu0 %v462
    %2345 = vmatmul.mubr.bf16.gmra.mrb[0].mxu0 %v461
    %v2346 = vpop.f32.mrb[0].mxu0
    %v2347 = vadd.f32 %v2306, %v2346
    %v2348 = vpop.f32.mrb[0].mxu0
    %v2349 = vpop.f32.mrb[0].mxu0
    %v2350 = vadd.f32 %v2309, %v2349
    %v2351 = vpop.f32.mrb[0].mxu0
    %2352 = vdwg.mxu0
    %2353 = vmatprep.subr.bf16.mxu0 %v1296
    %2354 = vmatpush1.bf16.xpose.msra.mxu0 %v1295
    %2355 = vmatprep.subr.bf16.mxu0 %v1328
    %2356 = vmatpush1.bf16.xpose.msra.mxu0 %v1327
    %2357 = vmatprep.subr.bf16.mxu0 %v1360
    %2358 = vmatpush1.bf16.xpose.msra.mxu0 %v1359
    %2359 = vmatprep.subr.bf16.mxu0 %v1392
    %2360 = vmatpush1.bf16.xpose.msra.mxu0 %v1391
    %2361 = vmatprep.subr.bf16.mxu0 %v1424
    %2362 = vmatpush1.bf16.xpose.msra.mxu0 %v1423
    %2363 = vmatprep.subr.bf16.mxu0 %v1456
    %2364 = vmatpush1.bf16.xpose.msra.mxu0 %v1455
    %2365 = vmatprep.subr.bf16.mxu0 %v1488
    %2366 = vmatpush1.bf16.xpose.msra.mxu0 %v1487
    %2367 = vmatprep.subr.bf16.mxu0 %v1520
    %2368 = vmatpush1.bf16.xpose.msra.mxu0 %v1519
    %2369 = vmatprep.subr.bf16.mxu0 0
    %2370 = vmatpush1.bf16.xpose.msra.mxu0 0
    %2371 = vmatprep.subr.bf16.mxu0 0
    %2372 = vmatpush1.bf16.xpose.msra.mxu0 0
    %2373 = vmatprep.subr.bf16.mxu0 0
    %2374 = vmatpush1.bf16.xpose.msra.mxu0 0
    %2375 = vmatprep.subr.bf16.mxu0 0
    %2376 = vmatpush1.bf16.xpose.msra.mxu0 0
    %2377 = vmatprep.subr.bf16.mxu0 0
    %2378 = vmatpush1.bf16.xpose.msra.mxu0 0
    %2379 = vmatprep.subr.bf16.mxu0 0
    %2380 = vmatpush1.bf16.xpose.msra.mxu0 0
    %2381 = vmatprep.subr.bf16.mxu0 0
    %2382 = vmatpush1.bf16.xpose.msra.mxu0 0
    %2383 = vmatprep.subr.bf16.mxu0 0
    %2384 = vmatpush1.bf16.xpose.msra.mxu0 0
    %2385 = vmatprep.mubr.bf16.mxu0 %v464
    %2386 = vmatmul.mubr.bf16.gmra.mrb[0].mxu0 %v463
    %v2387 = vpop.f32.mrb[0].mxu0
    %v2388 = vadd.f32 %v2347, %v2387
    %v2389 = vpop.f32.mrb[0].mxu0
    %v2390 = vpop.f32.mrb[0].mxu0
    %v2391 = vadd.f32 %v2350, %v2390
    %v2392 = vpop.f32.mrb[0].mxu0
    %2393 = vdwg.mxu0
    %2394 = vmatprep.subr.bf16.mxu0 %v1298
    %2395 = vmatpush1.bf16.xpose.msra.mxu0 %v1297
    %2396 = vmatprep.subr.bf16.mxu0 %v1330
    %2397 = vmatpush1.bf16.xpose.msra.mxu0 %v1329
    %2398 = vmatprep.subr.bf16.mxu0 %v1362
    %2399 = vmatpush1.bf16.xpose.msra.mxu0 %v1361
    %2400 = vmatprep.subr.bf16.mxu0 %v1394
    %2401 = vmatpush1.bf16.xpose.msra.mxu0 %v1393
    %2402 = vmatprep.subr.bf16.mxu0 %v1426
    %2403 = vmatpush1.bf16.xpose.msra.mxu0 %v1425
    %2404 = vmatprep.subr.bf16.mxu0 %v1458
    %2405 = vmatpush1.bf16.xpose.msra.mxu0 %v1457
    %2406 = vmatprep.subr.bf16.mxu0 %v1490
    %2407 = vmatpush1.bf16.xpose.msra.mxu0 %v1489
    %2408 = vmatprep.subr.bf16.mxu0 %v1522
    %2409 = vmatpush1.bf16.xpose.msra.mxu0 %v1521
    %2410 = vmatprep.subr.bf16.mxu0 0
    %2411 = vmatpush1.bf16.xpose.msra.mxu0 0
    %2412 = vmatprep.subr.bf16.mxu0 0
    %2413 = vmatpush1.bf16.xpose.msra.mxu0 0
    %2414 = vmatprep.subr.bf16.mxu0 0
    %2415 = vmatpush1.bf16.xpose.msra.mxu0 0
    %2416 = vmatprep.subr.bf16.mxu0 0
    %2417 = vmatpush1.bf16.xpose.msra.mxu0 0
    %2418 = vmatprep.subr.bf16.mxu0 0
    %2419 = vmatpush1.bf16.xpose.msra.mxu0 0
    %2420 = vmatprep.subr.bf16.mxu0 0
    %2421 = vmatpush1.bf16.xpose.msra.mxu0 0
    %2422 = vmatprep.subr.bf16.mxu0 0
    %2423 = vmatpush1.bf16.xpose.msra.mxu0 0
    %2424 = vmatprep.subr.bf16.mxu0 0
    %2425 = vmatpush1.bf16.xpose.msra.mxu0 0
    %2426 = vmatprep.mubr.bf16.mxu0 %v466
    %2427 = vmatmul.mubr.bf16.gmra.mrb[0].mxu0 %v465
    %v2428 = vpop.f32.mrb[0].mxu0
    %v2429 = vadd.f32 %v2388, %v2428
    %v2430 = vpop.f32.mrb[0].mxu0
    %v2431 = vpop.f32.mrb[0].mxu0
    %v2432 = vadd.f32 %v2391, %v2431
    %v2433 = vpop.f32.mrb[0].mxu0
    %2434 = vdwg.mxu0
    %v2435 = vsub.f32 0.0, %v2429
    %v2436 = vsub.f32 0.0, %v2432
    %v2437 = vmul.f32 %v2435, 1.442695
    %v2438 = vpow.pop %v2437
    %v2439 = vmul.f32 %v2436, 1.442695
    %v2440 = vpow.pop %v2439
    %v2441 = vadd.f32 %v2438, 1.0
    %v2442 = vadd.f32 %v2440, 1.0
    %v2443 = vrcp.pop %v2441
    %v2444 = vrcp.pop %v2442
    %2445 = vst [vmem:[#allocation7] sm:$0xff] %v2443
    %2446 = vst [vmem:[#allocation7 + $0x8] sm:$0xff] %v2444
    // Predicated region
    $region22: #{tpu_custom_call.1} parent=1 // pred_check
      _
    $region23: #{tpu_custom_call.1} parent=1 // pred_check_branch
      %2448 = sbr.rel (0) target = $region25
    $region24: #{tpu_custom_call.1} parent=1 // pred_region
      %s2450 = ssub.s32 256, 256
      %2451 = vsyncadd [#allocation4], %s2450
      %s2452 = sshll.u32 [#allocation7], 4
      %s2453 = int_to_ptr.vmem [resolvable:$true] %s2452
      %2458 = dma.vmem_to_hbm [thread:$0]  %s2453, 256, %s3, [#allocation4], 128, 128, 8
    $region25: #{tpu_custom_call.1} parent=1 // pred_fallthru
      _
    // Predicated region
    $region26: #{tpu_custom_call.1} parent=1 // pred_check
      _
    $region27: #{tpu_custom_call.1} parent=1 // pred_check_branch
      %2460 = sbr.rel (0) target = $region29
    $region28: #{tpu_custom_call.1} parent=1 // pred_region
      %2461 = dma.done [#allocation4], 256
    $region29: #{tpu_custom_call.1} parent=1 // pred_fallthru
      _
    %2462 = vsyncpa [#allocation3], 1
    %2463 = vsyncpa [#allocation6], 1
    %2464 = vsyncpa [#allocation4], 1

</llo_original>
